<compile_context>
chip_gen: v5e
topology: v5e:2x2
jax: 0.10.0
libtpu: 0.0.40
codegen_flags: <defaults>
</compile_context>

<pallas_src>
import jax
import jax.numpy as jnp
from jax import lax
from jax.experimental import pallas as pl
from jax.experimental.pallas import tpu as pltpu


def _tpu_generation() -> int:
    try:
        kind = jax.devices()[0].device_kind.lower()
    except Exception:
        return 6
    for g in (7, 6, 5, 4, 3, 2):
        if f"v{g}" in kind:
            return g
    return 6


def _vmem_limit_bytes(gen: int) -> int:
    """~0.75x of the physical VMEM of the current generation (headroom for the compiler)."""
    cap = None
    try:
        cap = int(pltpu.get_tpu_info().vmem_capacity_bytes)
    except Exception:
        cap = None
    if not cap:
        cap = (64 if gen >= 7 else 128) * 1024 * 1024
    return (cap * 3) // 4


def _pick_heads_per_block(n_head: int, d: int, target: int) -> int:
    """Smallest head pack whose lane width (hpb*d) is a multiple of `target` (else 128)."""
    for tgt in (target, 128):
        for hpb in range(1, n_head + 1):
            if n_head % hpb == 0 and (hpb * d) % tgt == 0:
                return hpb
    return n_head


def _pick_q_tile(T: int, max_tile: int = 256) -> int:
    for cand in (max_tile, 256, 128, 64, 32, 16, 8):
        if cand <= T and T % cand == 0:
            return cand
    return T


def _make_kernel(*, hpb, d, with_qk, has_mask, compute_dtype, qk_dtype):
    def kernel(*refs):
        it = iter(refs)
        xq_ref = next(it)                     # (1, tq, C)  query-row tile of x
        xkv_ref = next(it)                    # (1, T, C)   full x (K/V source), per-batch resident
        mask_ref = next(it) if has_mask else None
        wq_ref = next(it); bq_ref = next(it)
        wk_ref = next(it); wv_ref = next(it); bv_ref = next(it)
        wo_ref = next(it); bo_ref = next(it)
        out_ref = next(it)
        qk_ref = next(it) if with_qk else None
        acc_ref = next(it)                    # (tq, C)  f32 out-projection accumulator
        pv_ref = next(it)                     # (tq, hd) f32 packed per-head attention outputs
        kc_ref = next(it)                     # (n_hb, T, hd) K cache
        vc_ref = next(it)                     # (n_hb, T, hd) V cache

        t = pl.program_id(1)
        hb = pl.program_id(2)

        # K/V projections for this head block: computed once per (batch, head-block)
        # at the first query tile and cached in VMEM across all query tiles.
        @pl.when(t == 0)
        def _():
            xc = xkv_ref[0].astype(compute_dtype)          # (T, C)
            kc_ref[hb] = jnp.dot(
                xc, wk_ref[...],
                preferred_element_type=jnp.float32).astype(compute_dtype)
            vc_ref[hb] = (jnp.dot(
                xc, wv_ref[...],
                preferred_element_type=jnp.float32) + bv_ref[...]).astype(compute_dtype)

        # Q projection for this (query tile, head block); scale folded into wq/bq.
        xq = xq_ref[0].astype(compute_dtype)                # (tq, C)
        q = jnp.dot(xq, wq_ref[...],
                    preferred_element_type=jnp.float32) + bq_ref[...]   # (tq, hd) f32

        k = kc_ref[hb]                                      # (T, hd)
        v = vc_ref[hb]                                      # (T, hd)
        mask = mask_ref[...] if has_mask else None          # (tq, T)

        for i in range(hpb):                                # tiny static trip count
            lo, hi = i * d, (i + 1) * d
            qh = q[:, lo:hi].astype(compute_dtype)          # (tq, d)
            # 'qd,kd->qk' contraction -- no in-kernel transpose of k.
            s = lax.dot_general(qh, k[:, lo:hi],
                                dimension_numbers=(((1,), (1,)), ((), ())),
                                preferred_element_type=jnp.float32)      # (tq, T)
            if has_mask:
                s = s + mask
            if with_qk:
                qk_ref[0, i, :, :] = s.astype(qk_dtype)
            # Softmax over the full key axis.  NOTE: a fully-masked row gives
            # denom == 0 -> NaN, matching the pure-JAX / PyTorch reference.
            m = jnp.max(s, axis=-1, keepdims=True)
            p = jnp.exp(s - m)
            denom = jnp.sum(p, axis=-1, keepdims=True)
            r = pl.reciprocal(denom, approx=True)
            r = r * (2.0 - denom * r)                       # one Newton step -> near-exact
            w = (p * r).astype(compute_dtype)
            # Static-offset write into the packed PV scratch (no concat relayout).
            pv_ref[:, lo:hi] = jnp.dot(w, v[:, lo:hi],
                                       preferred_element_type=jnp.float32)

        # Partial out-projection for this head block: (tq, hd) @ (hd, C).
        contrib = jnp.dot(pv_ref[...].astype(compute_dtype), wo_ref[...],
                          preferred_element_type=jnp.float32)            # (tq, C)

        @pl.when(hb == 0)
        def _():
            acc_ref[...] = jnp.zeros_like(acc_ref)

        acc_ref[...] += contrib

        @pl.when(hb == pl.num_programs(2) - 1)
        def _():
            out_ref[0] = (acc_ref[...] + bo_ref[...]).astype(out_ref.dtype)

    return kernel


def multi_head_attention(x, params, n_head, mask=None, *, with_qk=True,
                         heads_per_block=None, q_tile=None,
                         compute_dtype=jnp.bfloat16, qk_dtype=jnp.float32):
    """Pallas implementation of Whisper MultiHeadAttention.forward (self-attention).

    x:    (B, T, C); mask: optional (T, T) additive mask (as in Whisper).
    Returns (out (B, T, C), qk (B, n_head, T, T) in qk_dtype, or None if with_qk=False).
    """
    B, T, C = x.shape
    assert C % n_head == 0
    d = C // n_head
    scale = d ** (-0.25)

    gen = _tpu_generation()
    lane_target = 128 if gen <= 5 else 256        # v5e MXU is 128-wide; v6e/v7x are 256-wide
    hpb = heads_per_block if heads_per_block is not None else _pick_heads_per_block(
        n_head, d, lane_target)
    assert n_head % hpb == 0
    n_hb = n_head // hpb
    hd = hpb * d

    tq = q_tile if q_tile is not None else _pick_q_tile(T)
    assert T % tq == 0
    n_tq = T // tq

    f32 = jnp.float32
    # Pre-transpose (kernel computes x @ W) and fold the d**-0.25 scale into q/k.
    wq_t = (params["wq"].astype(f32) * scale).T.astype(compute_dtype)   # (C, C)
    wk_t = (params["wk"].astype(f32) * scale).T.astype(compute_dtype)
    wv_t = params["wv"].T.astype(compute_dtype)
    wo_t = params["wo"].T.astype(compute_dtype)
    bq = (params["bq"].astype(f32) * scale).reshape(1, C)
    bv = params["bv"].astype(f32).reshape(1, C)
    bo = params["bo"].astype(f32).reshape(1, C)

    has_mask = mask is not None

    in_specs = [
        pl.BlockSpec((1, tq, C), lambda b, t, h: (b, t, 0)),   # x: query-row tile
        pl.BlockSpec((1, T, C), lambda b, t, h: (b, 0, 0)),    # x: full rows for K/V
    ]
    inputs = [x, x]
    if has_mask:
        mask_arr = mask[:T, :T].astype(f32)
        in_specs.append(pl.BlockSpec((tq, T), lambda b, t, h: (t, 0)))
        inputs.append(mask_arr)
    in_specs += [
        pl.BlockSpec((C, hd), lambda b, t, h: (0, h)),         # wq_t (head-block columns)
        pl.BlockSpec((1, hd), lambda b, t, h: (0, h)),         # bq
        pl.BlockSpec((C, hd), lambda b, t, h: (0, h)),         # wk_t
        pl.BlockSpec((C, hd), lambda b, t, h: (0, h)),         # wv_t
        pl.BlockSpec((1, hd), lambda b, t, h: (0, h)),         # bv
        pl.BlockSpec((hd, C), lambda b, t, h: (h, 0)),         # wo_t (head-block rows)
        pl.BlockSpec((1, C), lambda b, t, h: (0, 0)),          # bo
    ]
    inputs += [wq_t, bq, wk_t, wv_t, bv, wo_t, bo]

    out_spec_o = pl.BlockSpec((1, tq, C), lambda b, t, h: (b, t, 0))
    if with_qk:
        out_shape = (jax.ShapeDtypeStruct((B, T, C), x.dtype),
                     jax.ShapeDtypeStruct((B, n_head, T, T), qk_dtype))
        out_specs = (out_spec_o,
                     pl.BlockSpec((1, hpb, tq, T), lambda b, t, h: (b, h, t, 0)))
    else:
        out_shape = jax.ShapeDtypeStruct((B, T, C), x.dtype)
        out_specs = out_spec_o

    scratch_shapes = [
        pltpu.VMEM((tq, C), jnp.float32),           # out-projection accumulator
        pltpu.VMEM((tq, hd), jnp.float32),          # packed per-head PV
        pltpu.VMEM((n_hb, T, hd), compute_dtype),   # K cache per head block
        pltpu.VMEM((n_hb, T, hd), compute_dtype),   # V cache per head block
    ]

    w_bytes = jnp.dtype(compute_dtype).itemsize
    x_bytes = jnp.dtype(x.dtype).itemsize
    flops = B * (8 * T * C * C + 4 * T * T * C)
    bytes_accessed = (2 * B * T * C * x_bytes               # x reads (query tiles + K/V copy)
                      + B * n_tq * 4 * C * C * w_bytes      # weight slices per (batch, q-tile)
                      + B * T * C * x_bytes)                # output write
    if has_mask:
        bytes_accessed += B * T * T * 4
    if with_qk:
        bytes_accessed += B * n_head * T * T * jnp.dtype(qk_dtype).itemsize
    cost = pl.CostEstimate(flops=int(flops),
                           transcendentals=int(B * n_head * T * T),
                           bytes_accessed=int(bytes_accessed))

    kernel = _make_kernel(hpb=hpb, d=d, with_qk=with_qk, has_mask=has_mask,
                          compute_dtype=compute_dtype, qk_dtype=qk_dtype)

    outs = pl.pallas_call(
        kernel,
        out_shape=out_shape,
        grid_spec=pltpu.PrefetchScalarGridSpec(
            num_scalar_prefetch=0,
            grid=(B, n_tq, n_hb),
            in_specs=in_specs,
            out_specs=out_specs,
            scratch_shapes=scratch_shapes,
        ),
        compiler_params=pltpu.CompilerParams(
            # q-tile axis is "arbitrary" (t>0 reads the K/V cache written at t==0);
            # batch stays "parallel" for megacore sharding.
            dimension_semantics=("parallel", "arbitrary", "arbitrary"),
            vmem_limit_bytes=_vmem_limit_bytes(gen),
        ),
        cost_estimate=cost,
    )(*inputs)

    if with_qk:
        out, qk = outs
        return out, qk
    return outs, None


def reference_mha(x, params, n_head, mask=None):
    """Pure-JAX reference matching the PyTorch module semantics."""
    B, T, C = x.shape
    d = C // n_head
    scale = d ** (-0.25)
    q = x @ params["wq"].T + params["bq"]
    k = x @ params["wk"].T
    v = x @ params["wv"].T + params["bv"]
    qh = q.reshape(B, T, n_head, d).transpose(0, 2, 1, 3) * scale
    kh = k.reshape(B, T, n_head, d).transpose(0, 2, 3, 1) * scale
    vh = v.reshape(B, T, n_head, d).transpose(0, 2, 1, 3)
    qk = jnp.einsum("bhtd,bhds->bhts", qh, kh)
    if mask is not None:
        qk = qk + mask[:T, :T]
    qk = qk.astype(jnp.float32)
    w = jax.nn.softmax(qk, axis=-1).astype(q.dtype)
    wv = jnp.einsum("bhts,bhsd->bhtd", w, vh).transpose(0, 2, 1, 3).reshape(B, T, C)
    out = wv @ params["wo"].T + params["bo"]
    return out, qk


def init_params(key, n_state):
    ks = jax.random.split(key, 7)
    s = 0.02
    return {
        "wq": s * jax.random.normal(ks[0], (n_state, n_state), jnp.float32),
        "bq": s * jax.random.normal(ks[1], (n_state,), jnp.float32),
        "wk": s * jax.random.normal(ks[2], (n_state, n_state), jnp.float32),
        "wv": s * jax.random.normal(ks[3], (n_state, n_state), jnp.float32),
        "bv": s * jax.random.normal(ks[4], (n_state,), jnp.float32),
        "wo": s * jax.random.normal(ks[5], (n_state, n_state), jnp.float32),
        "bo": s * jax.random.normal(ks[6], (n_state,), jnp.float32),
    }


if __name__ == "__main__":
    # Small shapes consistent with the module: batch=2, seq=8, n_state=256, n_head=4.
    B, T, C, H = 2, 8, 256, 4
    key = jax.random.PRNGKey(0)
    kx, kp = jax.random.split(key)
    x = jax.random.normal(kx, (B, T, C), jnp.float32)
    params = init_params(kp, C)

    # Causal additive mask as built in Whisper's TextDecoder.
    causal = jnp.where(jnp.triu(jnp.ones((T, T), dtype=bool), k=1),
                       -jnp.inf, 0.0).astype(jnp.float32)

    # f32 compute path: exact parity with the reference (mask and no-mask variants).
    for mask in (None, causal):
        out, qk = multi_head_attention(x, params, H, mask=mask,
                                       compute_dtype=jnp.float32)
        out = jax.block_until_ready(out)
        qk = jax.block_until_ready(qk)
        ref_out, ref_qk = reference_mha(x, params, H, mask=mask)
        assert jnp.allclose(out, ref_out, atol=2e-4, rtol=2e-4), "output mismatch (f32)"
        assert jnp.allclose(qk, ref_qk, atol=2e-4, rtol=2e-4), "qk mismatch (f32)"

    # bf16 weights / MXU operands (f32 accumulation) + bf16 qk output: looser tolerance.
    out_b, qk_b = multi_head_attention(x, params, H, mask=causal,
                                       compute_dtype=jnp.bfloat16,
                                       qk_dtype=jnp.bfloat16)
    out_b = jax.block_until_ready(out_b)
    qk_b = jax.block_until_ready(qk_b)
    ref_out, ref_qk = reference_mha(x, params, H, mask=causal)
    assert jnp.allclose(out_b, ref_out, atol=3e-2, rtol=3e-2), "output mismatch (bf16)"
    assert jnp.allclose(qk_b.astype(jnp.float32), ref_qk, atol=3e-2, rtol=3e-2), \
        "qk mismatch (bf16)"

    # qk-free, mask-free specialized path: no score HBM traffic, no mask stream/add.
    out_only, maybe_qk = multi_head_attention(x, params, H, mask=None, with_qk=False,
                                              compute_dtype=jnp.float32)
    out_only = jax.block_until_ready(out_only)
    assert maybe_qk is None
    ref_out, _ = reference_mha(x, params, H, mask=None)
    assert jnp.allclose(out_only, ref_out, atol=2e-4, rtol=2e-4), "output mismatch (no-qk)"

    print("KERNEL_OK")
</pallas_src>

<mosaic_0001>
module attributes {stable_mosaic.version = 11 : i64} {
  func.func @kernel(%arg0: i32, %arg1: i32, %arg2: i32, %arg3: memref<1x8x256xf32, #tpu.memory_space<vmem>>, %arg4: memref<1x8x256xf32, #tpu.memory_space<vmem>>, %arg5: memref<256x256xf32, #tpu.memory_space<vmem>>, %arg6: memref<1x256xf32, #tpu.memory_space<vmem>>, %arg7: memref<256x256xf32, #tpu.memory_space<vmem>>, %arg8: memref<256x256xf32, #tpu.memory_space<vmem>>, %arg9: memref<1x256xf32, #tpu.memory_space<vmem>>, %arg10: memref<256x256xf32, #tpu.memory_space<vmem>>, %arg11: memref<1x256xf32, #tpu.memory_space<vmem>>, %arg12: memref<1x8x256xf32, #tpu.memory_space<vmem>>, %arg13: memref<1x4x8x8xf32, #tpu.memory_space<vmem>>, %arg14: memref<8x256xf32, #tpu.memory_space<vmem>>, %arg15: memref<8x256xf32, #tpu.memory_space<vmem>>, %arg16: memref<1x8x256xf32, #tpu.memory_space<vmem>>, %arg17: memref<1x8x256xf32, #tpu.memory_space<vmem>>) attributes {dimension_semantics = [#tpu.dimension_semantics<parallel>, #tpu.dimension_semantics<arbitrary>, #tpu.dimension_semantics<arbitrary>], iteration_bounds = array<i64: 2, 1, 1>, scalar_prefetch = 0 : i64, scratch_operands = 4 : i64, tpu.core_type = #tpu.core_type<tc>, window_params = [{transform_indices = @transform_0, window_bounds = array<i64: 1, 8, 256>}, {transform_indices = @transform_1, window_bounds = array<i64: 1, 8, 256>}, {transform_indices = @transform_2, window_bounds = array<i64: 256, 256>}, {transform_indices = @transform_3, window_bounds = array<i64: 1, 256>}, {transform_indices = @transform_4, window_bounds = array<i64: 256, 256>}, {transform_indices = @transform_5, window_bounds = array<i64: 256, 256>}, {transform_indices = @transform_6, window_bounds = array<i64: 1, 256>}, {transform_indices = @transform_7, window_bounds = array<i64: 256, 256>}, {pipeline_mode = #tpu.pipeline_mode<synchronous>, transform_indices = @transform_8, window_bounds = array<i64: 1, 256>}, {transform_indices = @transform_9, window_bounds = array<i64: 1, 8, 256>}, {transform_indices = @transform_10, window_bounds = array<i64: 1, 4, 8, 8>}]} {
    %c0_i32 = arith.constant 0 : i32
    %0 = arith.cmpi eq, %arg1, %c0_i32 : i32
    %1 = arith.extui %0 : i1 to i32
    %c0_i32_0 = arith.constant 0 : i32
    %2 = arith.cmpi ne, %1, %c0_i32_0 : i32
    scf.if %2 {
      %c0_62 = arith.constant 0 : index
      %c0_63 = arith.constant 0 : index
      %c0_64 = arith.constant 0 : index
      %120 = vector.load %arg4[%c0_62, %c0_63, %c0_64] : memref<1x8x256xf32, #tpu.memory_space<vmem>>, vector<1x8x256xf32>
      %121 = vector.shape_cast %120 : vector<1x8x256xf32> to vector<8x256xf32>
      %c0_65 = arith.constant 0 : index
      %c0_66 = arith.constant 0 : index
      %122 = vector.load %arg7[%c0_65, %c0_66] : memref<256x256xf32, #tpu.memory_space<vmem>>, vector<256x256xf32>
      %cst_67 = arith.constant dense<0.000000e+00> : vector<8x256xf32>
      %123 = tpu.matmul %121, %122, %cst_67 {dimension_numbers = #tpu.dot_dimension_numbers<[1], [0], [0], [1], [0, 0, 1, 1], [], []>} : vector<8x256xf32>, vector<256x256xf32>, vector<8x256xf32> -> vector<8x256xf32>
      %124 = arith.index_cast %arg2 : i32 to index
      %c0_68 = arith.constant 0 : index
      %c0_69 = arith.constant 0 : index
      %125 = vector.load %arg16[%124, %c0_68, %c0_69] : memref<1x8x256xf32, #tpu.memory_space<vmem>>, vector<1x8x256xf32>
      %126 = vector.shape_cast %125 : vector<1x8x256xf32> to vector<8x256xf32>
      %127 = vector.shape_cast %123 : vector<8x256xf32> to vector<1x8x256xf32>
      tpu.vector_store %arg16[%124, %c0_68, %c0_69], %127 {strides = array<i32>} : memref<1x8x256xf32, #tpu.memory_space<vmem>>, vector<1x8x256xf32>,
      %c0_70 = arith.constant 0 : index
      %c0_71 = arith.constant 0 : index
      %128 = vector.load %arg8[%c0_70, %c0_71] : memref<256x256xf32, #tpu.memory_space<vmem>>, vector<256x256xf32>
      %cst_72 = arith.constant dense<0.000000e+00> : vector<8x256xf32>
      %129 = tpu.matmul %121, %128, %cst_72 {dimension_numbers = #tpu.dot_dimension_numbers<[1], [0], [0], [1], [0, 0, 1, 1], [], []>} : vector<8x256xf32>, vector<256x256xf32>, vector<8x256xf32> -> vector<8x256xf32>
      %c0_73 = arith.constant 0 : index
      %c0_74 = arith.constant 0 : index
      %130 = vector.load %arg9[%c0_73, %c0_74] : memref<1x256xf32, #tpu.memory_space<vmem>>, vector<1x256xf32>
      %131 = vector.broadcast %130 : vector<1x256xf32> to vector<8x256xf32>
      %132 = arith.addf %129, %131 : vector<8x256xf32>
      %133 = arith.index_cast %arg2 : i32 to index
      %c0_75 = arith.constant 0 : index
      %c0_76 = arith.constant 0 : index
      %134 = vector.load %arg17[%133, %c0_75, %c0_76] : memref<1x8x256xf32, #tpu.memory_space<vmem>>, vector<1x8x256xf32>
      %135 = vector.shape_cast %134 : vector<1x8x256xf32> to vector<8x256xf32>
      %136 = vector.shape_cast %132 : vector<8x256xf32> to vector<1x8x256xf32>
      tpu.vector_store %arg17[%133, %c0_75, %c0_76], %136 {strides = array<i32>} : memref<1x8x256xf32, #tpu.memory_space<vmem>>, vector<1x8x256xf32>,
    } else {
    }
    %c0 = arith.constant 0 : index
    %c0_1 = arith.constant 0 : index
    %c0_2 = arith.constant 0 : index
    %3 = vector.load %arg3[%c0, %c0_1, %c0_2] : memref<1x8x256xf32, #tpu.memory_space<vmem>>, vector<1x8x256xf32>
    %4 = vector.shape_cast %3 : vector<1x8x256xf32> to vector<8x256xf32>
    %c0_3 = arith.constant 0 : index
    %c0_4 = arith.constant 0 : index
    %5 = vector.load %arg5[%c0_3, %c0_4] : memref<256x256xf32, #tpu.memory_space<vmem>>, vector<256x256xf32>
    %cst = arith.constant dense<0.000000e+00> : vector<8x256xf32>
    %6 = tpu.matmul %4, %5, %cst {dimension_numbers = #tpu.dot_dimension_numbers<[1], [0], [0], [1], [0, 0, 1, 1], [], []>} : vector<8x256xf32>, vector<256x256xf32>, vector<8x256xf32> -> vector<8x256xf32>
    %c0_5 = arith.constant 0 : index
    %c0_6 = arith.constant 0 : index
    %7 = vector.load %arg6[%c0_5, %c0_6] : memref<1x256xf32, #tpu.memory_space<vmem>>, vector<1x256xf32>
    %8 = vector.broadcast %7 : vector<1x256xf32> to vector<8x256xf32>
    %9 = arith.addf %6, %8 : vector<8x256xf32>
    %10 = arith.index_cast %arg2 : i32 to index
    %c0_7 = arith.constant 0 : index
    %c0_8 = arith.constant 0 : index
    %11 = vector.load %arg16[%10, %c0_7, %c0_8] : memref<1x8x256xf32, #tpu.memory_space<vmem>>, vector<1x8x256xf32>
    %12 = vector.shape_cast %11 : vector<1x8x256xf32> to vector<8x256xf32>
    %13 = arith.index_cast %arg2 : i32 to index
    %c0_9 = arith.constant 0 : index
    %c0_10 = arith.constant 0 : index
    %14 = vector.load %arg17[%13, %c0_9, %c0_10] : memref<1x8x256xf32, #tpu.memory_space<vmem>>, vector<1x8x256xf32>
    %15 = vector.shape_cast %14 : vector<1x8x256xf32> to vector<8x256xf32>
    %16 = vector.extract_strided_slice %9 {offsets = [0, 0], sizes = [8, 64], strides = [1, 1]} : vector<8x256xf32> to vector<8x64xf32>
    %17 = vector.extract_strided_slice %12 {offsets = [0, 0], sizes = [8, 64], strides = [1, 1]} : vector<8x256xf32> to vector<8x64xf32>
    %cst_11 = arith.constant dense<0.000000e+00> : vector<8x8xf32>
    %18 = tpu.matmul %16, %17, %cst_11 {dimension_numbers = #tpu.dot_dimension_numbers<[1], [1], [0], [0], [0, 0, 1, 0], [], []>} : vector<8x64xf32>, vector<8x64xf32>, vector<8x8xf32> -> vector<8x8xf32>
    %c0_12 = arith.constant 0 : index
    %c0_13 = arith.constant 0 : index
    %c0_14 = arith.constant 0 : index
    %c0_15 = arith.constant 0 : index
    %19 = vector.load %arg13[%c0_12, %c0_13, %c0_14, %c0_15] : memref<1x4x8x8xf32, #tpu.memory_space<vmem>>, vector<1x1x8x8xf32>
    %20 = vector.shape_cast %19 : vector<1x1x8x8xf32> to vector<8x8xf32>
    %21 = vector.shape_cast %18 : vector<8x8xf32> to vector<1x1x8x8xf32>
    tpu.vector_store %arg13[%c0_12, %c0_13, %c0_14, %c0_15], %21 {strides = array<i32>} : memref<1x4x8x8xf32, #tpu.memory_space<vmem>>, vector<1x1x8x8xf32>,
    %cst_16 = arith.constant dense<0xFF800000> : vector<8xf32>
    %22 = vector.multi_reduction <maximumf>, %18, %cst_16 [1] : vector<8x8xf32> to vector<8xf32>
    %23 = vector.shape_cast %22 : vector<8xf32> to vector<8x1xf32>
    %24 = vector.broadcast %23 : vector<8x1xf32> to vector<8x8xf32>
    %25 = arith.subf %18, %24 : vector<8x8xf32>
    %26 = math.exp %25 : vector<8x8xf32>
    %cst_17 = arith.constant dense<0.000000e+00> : vector<8xf32>
    %27 = vector.multi_reduction <add>, %26, %cst_17 [1] : vector<8x8xf32> to vector<8xf32>
    %28 = vector.shape_cast %27 : vector<8xf32> to vector<8x1xf32>
    %29 = tpu.reciprocal %28 {approx = true} : vector<8x1xf32> -> vector<8x1xf32>
    %30 = arith.mulf %28, %29 : vector<8x1xf32>
    %cst_18 = arith.constant 2.000000e+00 : f32
    %31 = vector.broadcast %cst_18 : f32 to vector<8x1xf32>
    %32 = arith.subf %31, %30 : vector<8x1xf32>
    %33 = arith.mulf %29, %32 : vector<8x1xf32>
    %34 = vector.broadcast %33 : vector<8x1xf32> to vector<8x8xf32>
    %35 = arith.mulf %26, %34 : vector<8x8xf32>
    %36 = vector.extract_strided_slice %15 {offsets = [0, 0], sizes = [8, 64], strides = [1, 1]} : vector<8x256xf32> to vector<8x64xf32>
    %cst_19 = arith.constant dense<0.000000e+00> : vector<8x64xf32>
    %37 = tpu.matmul %35, %36, %cst_19 {dimension_numbers = #tpu.dot_dimension_numbers<[1], [0], [0], [1], [0, 0, 1, 1], [], []>} : vector<8x8xf32>, vector<8x64xf32>, vector<8x64xf32> -> vector<8x64xf32>
    %c0_20 = arith.constant 0 : index
    %c0_21 = arith.constant 0 : index
    %38 = vector.load %arg15[%c0_20, %c0_21] : memref<8x256xf32, #tpu.memory_space<vmem>>, vector<8x64xf32>
    tpu.vector_store %arg15[%c0_20, %c0_21], %37 {strides = array<i32>} : memref<8x256xf32, #tpu.memory_space<vmem>>, vector<8x64xf32>,
    %39 = vector.extract_strided_slice %9 {offsets = [0, 64], sizes = [8, 64], strides = [1, 1]} : vector<8x256xf32> to vector<8x64xf32>
    %40 = vector.extract_strided_slice %12 {offsets = [0, 64], sizes = [8, 64], strides = [1, 1]} : vector<8x256xf32> to vector<8x64xf32>
    %cst_22 = arith.constant dense<0.000000e+00> : vector<8x8xf32>
    %41 = tpu.matmul %39, %40, %cst_22 {dimension_numbers = #tpu.dot_dimension_numbers<[1], [1], [0], [0], [0, 0, 1, 0], [], []>} : vector<8x64xf32>, vector<8x64xf32>, vector<8x8xf32> -> vector<8x8xf32>
    %c0_23 = arith.constant 0 : index
    %c1 = arith.constant 1 : index
    %c0_24 = arith.constant 0 : index
    %c0_25 = arith.constant 0 : index
    %42 = vector.load %arg13[%c0_23, %c1, %c0_24, %c0_25] : memref<1x4x8x8xf32, #tpu.memory_space<vmem>>, vector<1x1x8x8xf32>
    %43 = vector.shape_cast %42 : vector<1x1x8x8xf32> to vector<8x8xf32>
    %44 = vector.shape_cast %41 : vector<8x8xf32> to vector<1x1x8x8xf32>
    tpu.vector_store %arg13[%c0_23, %c1, %c0_24, %c0_25], %44 {strides = array<i32>} : memref<1x4x8x8xf32, #tpu.memory_space<vmem>>, vector<1x1x8x8xf32>,
    %cst_26 = arith.constant dense<0xFF800000> : vector<8xf32>
    %45 = vector.multi_reduction <maximumf>, %41, %cst_26 [1] : vector<8x8xf32> to vector<8xf32>
    %46 = vector.shape_cast %45 : vector<8xf32> to vector<8x1xf32>
    %47 = vector.broadcast %46 : vector<8x1xf32> to vector<8x8xf32>
    %48 = arith.subf %41, %47 : vector<8x8xf32>
    %49 = math.exp %48 : vector<8x8xf32>
    %cst_27 = arith.constant dense<0.000000e+00> : vector<8xf32>
    %50 = vector.multi_reduction <add>, %49, %cst_27 [1] : vector<8x8xf32> to vector<8xf32>
    %51 = vector.shape_cast %50 : vector<8xf32> to vector<8x1xf32>
    %52 = tpu.reciprocal %51 {approx = true} : vector<8x1xf32> -> vector<8x1xf32>
    %53 = arith.mulf %51, %52 : vector<8x1xf32>
    %cst_28 = arith.constant 2.000000e+00 : f32
    %54 = vector.broadcast %cst_28 : f32 to vector<8x1xf32>
    %55 = arith.subf %54, %53 : vector<8x1xf32>
    %56 = arith.mulf %52, %55 : vector<8x1xf32>
    %57 = vector.broadcast %56 : vector<8x1xf32> to vector<8x8xf32>
    %58 = arith.mulf %49, %57 : vector<8x8xf32>
    %59 = vector.extract_strided_slice %15 {offsets = [0, 64], sizes = [8, 64], strides = [1, 1]} : vector<8x256xf32> to vector<8x64xf32>
    %cst_29 = arith.constant dense<0.000000e+00> : vector<8x64xf32>
    %60 = tpu.matmul %58, %59, %cst_29 {dimension_numbers = #tpu.dot_dimension_numbers<[1], [0], [0], [1], [0, 0, 1, 1], [], []>} : vector<8x8xf32>, vector<8x64xf32>, vector<8x64xf32> -> vector<8x64xf32>
    %c0_30 = arith.constant 0 : index
    %c64 = arith.constant 64 : index
    %61 = vector.load %arg15[%c0_30, %c64] : memref<8x256xf32, #tpu.memory_space<vmem>>, vector<8x64xf32>
    tpu.vector_store %arg15[%c0_30, %c64], %60 {strides = array<i32>} : memref<8x256xf32, #tpu.memory_space<vmem>>, vector<8x64xf32>,
    %62 = vector.extract_strided_slice %9 {offsets = [0, 128], sizes = [8, 64], strides = [1, 1]} : vector<8x256xf32> to vector<8x64xf32>
    %63 = vector.extract_strided_slice %12 {offsets = [0, 128], sizes = [8, 64], strides = [1, 1]} : vector<8x256xf32> to vector<8x64xf32>
    %cst_31 = arith.constant dense<0.000000e+00> : vector<8x8xf32>
    %64 = tpu.matmul %62, %63, %cst_31 {dimension_numbers = #tpu.dot_dimension_numbers<[1], [1], [0], [0], [0, 0, 1, 0], [], []>} : vector<8x64xf32>, vector<8x64xf32>, vector<8x8xf32> -> vector<8x8xf32>
    %c0_32 = arith.constant 0 : index
    %c2 = arith.constant 2 : index
    %c0_33 = arith.constant 0 : index
    %c0_34 = arith.constant 0 : index
    %65 = vector.load %arg13[%c0_32, %c2, %c0_33, %c0_34] : memref<1x4x8x8xf32, #tpu.memory_space<vmem>>, vector<1x1x8x8xf32>
    %66 = vector.shape_cast %65 : vector<1x1x8x8xf32> to vector<8x8xf32>
    %67 = vector.shape_cast %64 : vector<8x8xf32> to vector<1x1x8x8xf32>
    tpu.vector_store %arg13[%c0_32, %c2, %c0_33, %c0_34], %67 {strides = array<i32>} : memref<1x4x8x8xf32, #tpu.memory_space<vmem>>, vector<1x1x8x8xf32>,
    %cst_35 = arith.constant dense<0xFF800000> : vector<8xf32>
    %68 = vector.multi_reduction <maximumf>, %64, %cst_35 [1] : vector<8x8xf32> to vector<8xf32>
    %69 = vector.shape_cast %68 : vector<8xf32> to vector<8x1xf32>
    %70 = vector.broadcast %69 : vector<8x1xf32> to vector<8x8xf32>
    %71 = arith.subf %64, %70 : vector<8x8xf32>
    %72 = math.exp %71 : vector<8x8xf32>
    %cst_36 = arith.constant dense<0.000000e+00> : vector<8xf32>
    %73 = vector.multi_reduction <add>, %72, %cst_36 [1] : vector<8x8xf32> to vector<8xf32>
    %74 = vector.shape_cast %73 : vector<8xf32> to vector<8x1xf32>
    %75 = tpu.reciprocal %74 {approx = true} : vector<8x1xf32> -> vector<8x1xf32>
    %76 = arith.mulf %74, %75 : vector<8x1xf32>
    %cst_37 = arith.constant 2.000000e+00 : f32
    %77 = vector.broadcast %cst_37 : f32 to vector<8x1xf32>
    %78 = arith.subf %77, %76 : vector<8x1xf32>
    %79 = arith.mulf %75, %78 : vector<8x1xf32>
    %80 = vector.broadcast %79 : vector<8x1xf32> to vector<8x8xf32>
    %81 = arith.mulf %72, %80 : vector<8x8xf32>
    %82 = vector.extract_strided_slice %15 {offsets = [0, 128], sizes = [8, 64], strides = [1, 1]} : vector<8x256xf32> to vector<8x64xf32>
    %cst_38 = arith.constant dense<0.000000e+00> : vector<8x64xf32>
    %83 = tpu.matmul %81, %82, %cst_38 {dimension_numbers = #tpu.dot_dimension_numbers<[1], [0], [0], [1], [0, 0, 1, 1], [], []>} : vector<8x8xf32>, vector<8x64xf32>, vector<8x64xf32> -> vector<8x64xf32>
    %c0_39 = arith.constant 0 : index
    %c128 = arith.constant 128 : index
    %84 = vector.load %arg15[%c0_39, %c128] : memref<8x256xf32, #tpu.memory_space<vmem>>, vector<8x64xf32>
    tpu.vector_store %arg15[%c0_39, %c128], %83 {strides = array<i32>} : memref<8x256xf32, #tpu.memory_space<vmem>>, vector<8x64xf32>,
    %85 = vector.extract_strided_slice %9 {offsets = [0, 192], sizes = [8, 64], strides = [1, 1]} : vector<8x256xf32> to vector<8x64xf32>
    %86 = vector.extract_strided_slice %12 {offsets = [0, 192], sizes = [8, 64], strides = [1, 1]} : vector<8x256xf32> to vector<8x64xf32>
    %cst_40 = arith.constant dense<0.000000e+00> : vector<8x8xf32>
    %87 = tpu.matmul %85, %86, %cst_40 {dimension_numbers = #tpu.dot_dimension_numbers<[1], [1], [0], [0], [0, 0, 1, 0], [], []>} : vector<8x64xf32>, vector<8x64xf32>, vector<8x8xf32> -> vector<8x8xf32>
    %c0_41 = arith.constant 0 : index
    %c3 = arith.constant 3 : index
    %c0_42 = arith.constant 0 : index
    %c0_43 = arith.constant 0 : index
    %88 = vector.load %arg13[%c0_41, %c3, %c0_42, %c0_43] : memref<1x4x8x8xf32, #tpu.memory_space<vmem>>, vector<1x1x8x8xf32>
    %89 = vector.shape_cast %88 : vector<1x1x8x8xf32> to vector<8x8xf32>
    %90 = vector.shape_cast %87 : vector<8x8xf32> to vector<1x1x8x8xf32>
    tpu.vector_store %arg13[%c0_41, %c3, %c0_42, %c0_43], %90 {strides = array<i32>} : memref<1x4x8x8xf32, #tpu.memory_space<vmem>>, vector<1x1x8x8xf32>,
    %cst_44 = arith.constant dense<0xFF800000> : vector<8xf32>
    %91 = vector.multi_reduction <maximumf>, %87, %cst_44 [1] : vector<8x8xf32> to vector<8xf32>
    %92 = vector.shape_cast %91 : vector<8xf32> to vector<8x1xf32>
    %93 = vector.broadcast %92 : vector<8x1xf32> to vector<8x8xf32>
    %94 = arith.subf %87, %93 : vector<8x8xf32>
    %95 = math.exp %94 : vector<8x8xf32>
    %cst_45 = arith.constant dense<0.000000e+00> : vector<8xf32>
    %96 = vector.multi_reduction <add>, %95, %cst_45 [1] : vector<8x8xf32> to vector<8xf32>
    %97 = vector.shape_cast %96 : vector<8xf32> to vector<8x1xf32>
    %98 = tpu.reciprocal %97 {approx = true} : vector<8x1xf32> -> vector<8x1xf32>
    %99 = arith.mulf %97, %98 : vector<8x1xf32>
    %cst_46 = arith.constant 2.000000e+00 : f32
    %100 = vector.broadcast %cst_46 : f32 to vector<8x1xf32>
    %101 = arith.subf %100, %99 : vector<8x1xf32>
    %102 = arith.mulf %98, %101 : vector<8x1xf32>
    %103 = vector.broadcast %102 : vector<8x1xf32> to vector<8x8xf32>
    %104 = arith.mulf %95, %103 : vector<8x8xf32>
    %105 = vector.extract_strided_slice %15 {offsets = [0, 192], sizes = [8, 64], strides = [1, 1]} : vector<8x256xf32> to vector<8x64xf32>
    %cst_47 = arith.constant dense<0.000000e+00> : vector<8x64xf32>
    %106 = tpu.matmul %104, %105, %cst_47 {dimension_numbers = #tpu.dot_dimension_numbers<[1], [0], [0], [1], [0, 0, 1, 1], [], []>} : vector<8x8xf32>, vector<8x64xf32>, vector<8x64xf32> -> vector<8x64xf32>
    %c0_48 = arith.constant 0 : index
    %c192 = arith.constant 192 : index
    %107 = vector.load %arg15[%c0_48, %c192] : memref<8x256xf32, #tpu.memory_space<vmem>>, vector<8x64xf32>
    tpu.vector_store %arg15[%c0_48, %c192], %106 {strides = array<i32>} : memref<8x256xf32, #tpu.memory_space<vmem>>, vector<8x64xf32>,
    %c0_49 = arith.constant 0 : index
    %c0_50 = arith.constant 0 : index
    %108 = vector.load %arg15[%c0_49, %c0_50] : memref<8x256xf32, #tpu.memory_space<vmem>>, vector<8x256xf32>
    %c0_51 = arith.constant 0 : index
    %c0_52 = arith.constant 0 : index
    %109 = vector.load %arg10[%c0_51, %c0_52] : memref<256x256xf32, #tpu.memory_space<vmem>>, vector<256x256xf32>
    %cst_53 = arith.constant dense<0.000000e+00> : vector<8x256xf32>
    %110 = tpu.matmul %108, %109, %cst_53 {dimension_numbers = #tpu.dot_dimension_numbers<[1], [0], [0], [1], [0, 0, 1, 1], [], []>} : vector<8x256xf32>, vector<256x256xf32>, vector<8x256xf32> -> vector<8x256xf32>
    %c0_i32_54 = arith.constant 0 : i32
    %111 = arith.cmpi eq, %arg2, %c0_i32_54 : i32
    %112 = arith.extui %111 : i1 to i32
    %c0_i32_55 = arith.constant 0 : i32
    %113 = arith.cmpi ne, %112, %c0_i32_55 : i32
    scf.if %113 {
      %cst_62 = arith.constant 0.000000e+00 : f32
      %120 = vector.broadcast %cst_62 : f32 to vector<8x256xf32>
      %c0_63 = arith.constant 0 : index
      %c0_64 = arith.constant 0 : index
      %121 = vector.load %arg14[%c0_63, %c0_64] : memref<8x256xf32, #tpu.memory_space<vmem>>, vector<8x256xf32>
      tpu.vector_store %arg14[%c0_63, %c0_64], %120 {strides = array<i32>} : memref<8x256xf32, #tpu.memory_space<vmem>>, vector<8x256xf32>,
    } else {
    }
    %c0_56 = arith.constant 0 : index
    %c0_57 = arith.constant 0 : index
    %114 = vector.load %arg14[%c0_56, %c0_57] : memref<8x256xf32, #tpu.memory_space<vmem>>, vector<8x256xf32>
    %115 = arith.addf %114, %110 : vector<8x256xf32>
    %c0_58 = arith.constant 0 : index
    %c0_59 = arith.constant 0 : index
    %116 = vector.load %arg14[%c0_58, %c0_59] : memref<8x256xf32, #tpu.memory_space<vmem>>, vector<8x256xf32>
    tpu.vector_store %arg14[%c0_58, %c0_59], %115 {strides = array<i32>} : memref<8x256xf32, #tpu.memory_space<vmem>>, vector<8x256xf32>,
    %c0_i32_60 = arith.constant 0 : i32
    %117 = arith.cmpi eq, %arg2, %c0_i32_60 : i32
    %118 = arith.extui %117 : i1 to i32
    %c0_i32_61 = arith.constant 0 : i32
    %119 = arith.cmpi ne, %118, %c0_i32_61 : i32
    scf.if %119 {
      %c0_62 = arith.constant 0 : index
      %c0_63 = arith.constant 0 : index
      %120 = vector.load %arg14[%c0_62, %c0_63] : memref<8x256xf32, #tpu.memory_space<vmem>>, vector<8x256xf32>
      %c0_64 = arith.constant 0 : index
      %c0_65 = arith.constant 0 : index
      %121 = vector.load %arg11[%c0_64, %c0_65] : memref<1x256xf32, #tpu.memory_space<vmem>>, vector<1x256xf32>
      %122 = vector.broadcast %121 : vector<1x256xf32> to vector<8x256xf32>
      %123 = arith.addf %120, %122 : vector<8x256xf32>
      %c0_66 = arith.constant 0 : index
      %c0_67 = arith.constant 0 : index
      %c0_68 = arith.constant 0 : index
      %124 = vector.load %arg12[%c0_66, %c0_67, %c0_68] : memref<1x8x256xf32, #tpu.memory_space<vmem>>, vector<1x8x256xf32>
      %125 = vector.shape_cast %124 : vector<1x8x256xf32> to vector<8x256xf32>
      %126 = vector.shape_cast %123 : vector<8x256xf32> to vector<1x8x256xf32>
      tpu.vector_store %arg12[%c0_66, %c0_67, %c0_68], %126 {strides = array<i32>} : memref<1x8x256xf32, #tpu.memory_space<vmem>>, vector<1x8x256xf32>,
    } else {
    }
    return
  }
  func.func @transform_0(%arg0: i32, %arg1: i32, %arg2: i32) -> (i32, i32, i32) {
    %c0_i32 = arith.constant 0 : i32
    %c0_i32_0 = arith.constant 0 : i32
    return %arg0, %arg1, %c0_i32 : i32, i32, i32
  }
  func.func @transform_1(%arg0: i32, %arg1: i32, %arg2: i32) -> (i32, i32, i32) {
    %c0_i32 = arith.constant 0 : i32
    %c0_i32_0 = arith.constant 0 : i32
    %c0_i32_1 = arith.constant 0 : i32
    return %arg0, %c0_i32, %c0_i32_0 : i32, i32, i32
  }
  func.func @transform_2(%arg0: i32, %arg1: i32, %arg2: i32) -> (i32, i32) {
    %c0_i32 = arith.constant 0 : i32
    %c0_i32_0 = arith.constant 0 : i32
    return %c0_i32, %arg2 : i32, i32
  }
  func.func @transform_3(%arg0: i32, %arg1: i32, %arg2: i32) -> (i32, i32) {
    %c0_i32 = arith.constant 0 : i32
    %c0_i32_0 = arith.constant 0 : i32
    return %c0_i32, %arg2 : i32, i32
  }
  func.func @transform_4(%arg0: i32, %arg1: i32, %arg2: i32) -> (i32, i32) {
    %c0_i32 = arith.constant 0 : i32
    %c0_i32_0 = arith.constant 0 : i32
    return %c0_i32, %arg2 : i32, i32
  }
  func.func @transform_5(%arg0: i32, %arg1: i32, %arg2: i32) -> (i32, i32) {
    %c0_i32 = arith.constant 0 : i32
    %c0_i32_0 = arith.constant 0 : i32
    return %c0_i32, %arg2 : i32, i32
  }
  func.func @transform_6(%arg0: i32, %arg1: i32, %arg2: i32) -> (i32, i32) {
    %c0_i32 = arith.constant 0 : i32
    %c0_i32_0 = arith.constant 0 : i32
    return %c0_i32, %arg2 : i32, i32
  }
  func.func @transform_7(%arg0: i32, %arg1: i32, %arg2: i32) -> (i32, i32) {
    %c0_i32 = arith.constant 0 : i32
    %c0_i32_0 = arith.constant 0 : i32
    return %arg2, %c0_i32 : i32, i32
  }
  func.func @transform_8(%arg0: i32, %arg1: i32, %arg2: i32) -> (i32, i32) {
    %c0_i32 = arith.constant 0 : i32
    %c0_i32_0 = arith.constant 0 : i32
    %c0_i32_1 = arith.constant 0 : i32
    return %c0_i32, %c0_i32_0 : i32, i32
  }
  func.func @transform_9(%arg0: i32, %arg1: i32, %arg2: i32) -> (i32, i32, i32) {
    %c0_i32 = arith.constant 0 : i32
    %c0_i32_0 = arith.constant 0 : i32
    return %arg0, %arg1, %c0_i32 : i32, i32, i32
  }
  func.func @transform_10(%arg0: i32, %arg1: i32, %arg2: i32) -> (i32, i32, i32, i32) {
    %c0_i32 = arith.constant 0 : i32
    %c0_i32_0 = arith.constant 0 : i32
    return %arg0, %arg2, %arg1, %c0_i32 : i32, i32, i32, i32
  }
}

</mosaic_0001>

<llo_original>
// kernel: tpu_custom_call.1
$region0: #{tpu_custom_call.1}
  #allocation0 [shape = 'u32[]', space=smem, size = 0x4, offset = 0x4, fixed_abs, tag = 'smem constant byte address 0x4 - core index']
  #allocation1 [shape = 'u32[72,128]{1,0:T(1,128)}', space=vmem, size = 0x9000, scoped, tag = 'internal scratch']
  #allocation2 [shape = 'f32[8,256]{1,0:T(8,128)}', space=vmem, size = 0x2000, scoped, tag = 'scratch operand']
  #allocation3 [shape = 'f32[8,256]{1,0:T(8,128)}', space=vmem, size = 0x2000, scoped, tag = 'scratch operand']
  #allocation4 [shape = 'f32[1,8,256]{2,1,0:T(8,128)}', space=vmem, size = 0x2000, scoped, tag = 'scratch operand']
  #allocation5 [shape = 'f32[1,8,256]{2,1,0:T(8,128)}', space=vmem, size = 0x2000, scoped, tag = 'scratch operand']
  %s0 = inlined_call_operand.hbm [shape: f32[2,8,256], index: 0, kind: input, shape index: {}]
  %s1 = inlined_call_operand.hbm [shape: f32[2,8,256], index: 1, kind: input, shape index: {}]
  %s2 = inlined_call_operand.hbm [shape: f32[256,256], index: 2, kind: input, shape index: {}]
  %s3 = inlined_call_operand.vmem [shape: f32[1,256], index: 3, kind: input, shape index: {}]
  %s4 = inlined_call_operand.hbm [shape: f32[256,256], index: 4, kind: input, shape index: {}]
  %s5 = inlined_call_operand.hbm [shape: f32[256,256], index: 5, kind: input, shape index: {}]
  %s6 = inlined_call_operand.vmem [shape: f32[1,256], index: 6, kind: input, shape index: {}]
  %s7 = inlined_call_operand.hbm [shape: f32[256,256], index: 7, kind: input, shape index: {}]
  %s8 = inlined_call_operand.vmem [shape: f32[1,256], index: 8, kind: input, shape index: {}]
  %s9 = inlined_call_operand.hbm [shape: f32[2,8,256], index: 9, kind: output, shape index: {0}]
  %s10 = inlined_call_operand.hbm [shape: f32[2,4,8,8], index: 10, kind: output, shape index: {1}]
  %11 = xla_tuple %s9, %s10
  %s12 = sld [smem:[#allocation0]]
  $region113: #{tpu_custom_call.1} parent=0
    _
  %s14 = ssub.s32 1, %s12
  %s15 = scalar_select 0, %s14, %s12
  $region1: #{tpu_custom_call.1} parent=0
    #allocation6 [shape = 'u8[16384]{0}', space=vmem, size = 0x4000, scoped, tag = 'input window, operand 0']
    #allocation7 [shape = 's32[2]{0}', space=sflag, size = 0x8, scoped, tag = 'scoped memory for tpu_custom_call.1']
    #allocation8 [shape = 's32[2]{0}', space=sflag, size = 0x8, scoped, tag = 'scoped memory for tpu_custom_call.1']
    #allocation9 [shape = 'u8[16384]{0}', space=vmem, size = 0x4000, scoped, tag = 'input window, operand 1']
    #allocation10 [shape = 's32[2]{0}', space=sflag, size = 0x8, scoped, tag = 'scoped memory for tpu_custom_call.1']
    #allocation11 [shape = 'u8[262144]{0}', space=vmem, size = 0x40000, scoped, tag = 'input window, operand 2, single buffered']
    #allocation12 [shape = 'u8[262144]{0}', space=vmem, size = 0x40000, scoped, tag = 'input window, operand 4, single buffered']
    #allocation13 [shape = 's32[1]{0}', space=sflag, size = 0x4, scoped, tag = 'scoped memory for tpu_custom_call.1']
    #allocation14 [shape = 'u8[262144]{0}', space=vmem, size = 0x40000, scoped, tag = 'input window, operand 5, single buffered']
    #allocation15 [shape = 'u8[262144]{0}', space=vmem, size = 0x40000, scoped, tag = 'input window, operand 7, single buffered']
    #allocation16 [shape = 's32[1]{0}', space=sflag, size = 0x4, scoped, tag = 'scoped memory for tpu_custom_call.1']
    #allocation17 [shape = 'u8[16384]{0}', space=vmem, size = 0x4000, scoped, tag = 'output window, operand 0']
    #allocation18 [shape = 'u8[32768]{0}', space=vmem, size = 0x8000, scoped, tag = 'output window, operand 1']
    #allocation19 [shape = 's32[2]{0}', space=sflag, size = 0x8, scoped, tag = 'scoped memory for tpu_custom_call.1']
    %16 = vsyncpa [#allocation7], 0
    %s17 = scalar_lea.sflag [#allocation7], 1
    %18 = vsyncpa %s17, 0
    %19 = vsyncpa [#allocation10], 0
    %s20 = scalar_lea.sflag [#allocation10], 1
    %21 = vsyncpa %s20, 0
    %22 = vsyncpa [#allocation13], 0
    %23 = vsyncpa [#allocation16], 0
    %24 = vsyncpa [#allocation8], 0
    %s25 = scalar_lea.sflag [#allocation8], 1
    %26 = vsyncpa %s25, 0
    %27 = vsyncpa [#allocation19], 0
    %s28 = scalar_lea.sflag [#allocation19], 1
    %29 = vsyncpa %s28, 0
    loop: start=0, step=1, limit=4
    $region2: #{tpu_custom_call.1} parent=1 // loop_pre_header
      _
    $region3: #{tpu_custom_call.1} parent=1 // loop_header
      %s31 = sphi 0, %s35
      %p32 = scmp.ge.s32.totalorder %s31, 4
      %s38 = sphi 0, %s57
      %s39 = sphi 0, %s53
      %s40 = sphi 0, %s49
      %s41 = sphi 0, %s38
      %s42 = sphi 0, %s39
      %s43 = sphi 0, %s40
      %s44 = sphi 0, %s41
      %s45 = sphi 0, %s42
      %s46 = sphi 0, %s43
      %s62 = sphi 0, %s64
      %s65 = sphi 0, %s62
      %s66 = sphi 0, %s65
      %s82 = sphi 0, %s66
      %s88 = sphi 0, %s90
      %s91 = sphi 0, %s88
      %s92 = sphi 0, %s91
      %s108 = sphi 0, %s92
      %s114 = sphi 0, %s116
      %s117 = sphi 0, %s114
      %s118 = sphi 0, %s117
      %s134 = sphi 0, %s118
      %s140 = sphi 0, %s142
      %s143 = sphi 0, %s140
      %s144 = sphi 0, %s143
      %s160 = sphi 0, %s144
      %s166 = sphi 0, %s168
      %s169 = sphi 0, %s166
      %s170 = sphi 0, %s169
      %s186 = sphi 0, %s170
      %s192 = sphi 0, %s194
      %s195 = sphi 0, %s192
      %s196 = sphi 0, %s195
      %s212 = sphi 0, %s196
      %s218 = sphi 0, %s220
      %s221 = sphi 0, %s218
      %s222 = sphi 0, %s221
      %s238 = sphi 0, %s222
      %s244 = sphi 0, %s246
      %s247 = sphi 0, %s244
      %s248 = sphi 0, %s247
      %s264 = sphi 0, %s248
      %s268 = sphi 0, %s268
      %s270 = sphi 0, %s268
      %s271 = sphi 0, %s270
      %s285 = sphi 0, %s271
      %s293 = sphi 0, %s295
      %s296 = sphi 0, %s293
      %s297 = sphi 0, %s296
      %s313 = sphi 0, %s297
      %s323 = sphi 0, %s325
      %s326 = sphi 0, %s323
      %s327 = sphi 0, %s326
      %s343 = sphi 0, %s327
    $region4: #{tpu_custom_call.1} parent=1 // loop_header_branch
      %34 = sbr.rel (%p32) target = $region8
    $region5: #{tpu_custom_call.1} parent=1 // loop_body
      %s36 = ssub.s32 %s31, 1
      %s37 = ssub.s32 %s31, 2
      %s47 = sadd.s32 1, %s40
      %p48 = scmp.ge.s32.totalorder %s47, 1
      %s49 = scalar_select %p48, 0, %s47
      %s50 = sadd.s32 1, %s39
      %s51 = scalar_select %p48, %s50, %s39
      %p52 = scmp.ge.s32.totalorder %s51, 1
      %s53 = scalar_select %p52, 0, %s51
      %s54 = sadd.s32 1, %s38
      %s55 = scalar_select %p52, %s54, %s38
      %p56 = scmp.ge.s32.totalorder %s55, 2
      %s57 = scalar_select %p56, 0, %s55
      %s58 = ssub.s32 %s38, %s57
      %s59 = ssub.s32 %s39, %s53
      %s60 = sor.u32 %s58, %s59
      %p61 = scmp.eq.s32.totalorder %s60, 0
      %s63 = sadd.s32 %s62, 1
      %s64 = scalar_select %p61, %s62, %s63
      %p67 = pneg %p61
      %p68 = scmp.eq.s32.totalorder %s31, 1
      %p69 = por %p67, %p68
      %p70 = scmp.ne.s32.totalorder %s62, %s65
      %p71 = scmp.eq.s32.totalorder %s31, 0
      %p72 = por %p70, %p71
      %p73 = scmp.ne.s32.totalorder %s62, %s65
      %p74 = scmp.eq.s32.totalorder %s36, 1
      %p75 = por %p73, %p74
      %p76 = scmp.ne.s32.totalorder %s65, %s66
      %p77 = scmp.eq.s32.totalorder %s36, 0
      %p78 = por %p76, %p77
      %p79 = scmp.ne.s32.totalorder %s65, %s66
      %p80 = scmp.eq.s32.totalorder %s37, 1
      %p81 = por %p79, %p80
      %p83 = scmp.ne.s32.totalorder %s66, %s82
      %p84 = scmp.eq.s32.totalorder %s37, 0
      %p85 = por %p83, %p84
      %s86 = ssub.s32 %s38, %s57
      %p87 = scmp.eq.s32.totalorder %s86, 0
      %s89 = sadd.s32 %s88, 1
      %s90 = scalar_select %p87, %s88, %s89
      %p93 = pneg %p87
      %p94 = scmp.eq.s32.totalorder %s31, 1
      %p95 = por %p93, %p94
      %p96 = scmp.ne.s32.totalorder %s88, %s91
      %p97 = scmp.eq.s32.totalorder %s31, 0
      %p98 = por %p96, %p97
      %p99 = scmp.ne.s32.totalorder %s88, %s91
      %p100 = scmp.eq.s32.totalorder %s36, 1
      %p101 = por %p99, %p100
      %p102 = scmp.ne.s32.totalorder %s91, %s92
      %p103 = scmp.eq.s32.totalorder %s36, 0
      %p104 = por %p102, %p103
      %p105 = scmp.ne.s32.totalorder %s91, %s92
      %p106 = scmp.eq.s32.totalorder %s37, 1
      %p107 = por %p105, %p106
      %p109 = scmp.ne.s32.totalorder %s92, %s108
      %p110 = scmp.eq.s32.totalorder %s37, 0
      %p111 = por %p109, %p110
      %s112 = ssub.s32 %s40, %s49
      %p113 = scmp.eq.s32.totalorder %s112, 0
      %s115 = sadd.s32 %s114, 1
      %s116 = scalar_select %p113, %s114, %s115
      %p119 = pneg %p113
      %p120 = scmp.eq.s32.totalorder %s31, 1
      %p121 = por %p119, %p120
      %p122 = scmp.ne.s32.totalorder %s114, %s117
      %p123 = scmp.eq.s32.totalorder %s31, 0
      %p124 = por %p122, %p123
      %p125 = scmp.ne.s32.totalorder %s114, %s117
      %p126 = scmp.eq.s32.totalorder %s36, 1
      %p127 = por %p125, %p126
      %p128 = scmp.ne.s32.totalorder %s117, %s118
      %p129 = scmp.eq.s32.totalorder %s36, 0
      %p130 = por %p128, %p129
      %p131 = scmp.ne.s32.totalorder %s117, %s118
      %p132 = scmp.eq.s32.totalorder %s37, 1
      %p133 = por %p131, %p132
      %p135 = scmp.ne.s32.totalorder %s118, %s134
      %p136 = scmp.eq.s32.totalorder %s37, 0
      %p137 = por %p135, %p136
      %s138 = ssub.s32 %s40, %s49
      %p139 = scmp.eq.s32.totalorder %s138, 0
      %s141 = sadd.s32 %s140, 1
      %s142 = scalar_select %p139, %s140, %s141
      %p145 = pneg %p139
      %p146 = scmp.eq.s32.totalorder %s31, 1
      %p147 = por %p145, %p146
      %p148 = scmp.ne.s32.totalorder %s140, %s143
      %p149 = scmp.eq.s32.totalorder %s31, 0
      %p150 = por %p148, %p149
      %p151 = scmp.ne.s32.totalorder %s140, %s143
      %p152 = scmp.eq.s32.totalorder %s36, 1
      %p153 = por %p151, %p152
      %p154 = scmp.ne.s32.totalorder %s143, %s144
      %p155 = scmp.eq.s32.totalorder %s36, 0
      %p156 = por %p154, %p155
      %p157 = scmp.ne.s32.totalorder %s143, %s144
      %p158 = scmp.eq.s32.totalorder %s37, 1
      %p159 = por %p157, %p158
      %p161 = scmp.ne.s32.totalorder %s144, %s160
      %p162 = scmp.eq.s32.totalorder %s37, 0
      %p163 = por %p161, %p162
      %s164 = ssub.s32 %s40, %s49
      %p165 = scmp.eq.s32.totalorder %s164, 0
      %s167 = sadd.s32 %s166, 1
      %s168 = scalar_select %p165, %s166, %s167
      %p171 = pneg %p165
      %p172 = scmp.eq.s32.totalorder %s31, 1
      %p173 = por %p171, %p172
      %p174 = scmp.ne.s32.totalorder %s166, %s169
      %p175 = scmp.eq.s32.totalorder %s31, 0
      %p176 = por %p174, %p175
      %p177 = scmp.ne.s32.totalorder %s166, %s169
      %p178 = scmp.eq.s32.totalorder %s36, 1
      %p179 = por %p177, %p178
      %p180 = scmp.ne.s32.totalorder %s169, %s170
      %p181 = scmp.eq.s32.totalorder %s36, 0
      %p182 = por %p180, %p181
      %p183 = scmp.ne.s32.totalorder %s169, %s170
      %p184 = scmp.eq.s32.totalorder %s37, 1
      %p185 = por %p183, %p184
      %p187 = scmp.ne.s32.totalorder %s170, %s186
      %p188 = scmp.eq.s32.totalorder %s37, 0
      %p189 = por %p187, %p188
      %s190 = ssub.s32 %s40, %s49
      %p191 = scmp.eq.s32.totalorder %s190, 0
      %s193 = sadd.s32 %s192, 1
      %s194 = scalar_select %p191, %s192, %s193
      %p197 = pneg %p191
      %p198 = scmp.eq.s32.totalorder %s31, 1
      %p199 = por %p197, %p198
      %p200 = scmp.ne.s32.totalorder %s192, %s195
      %p201 = scmp.eq.s32.totalorder %s31, 0
      %p202 = por %p200, %p201
      %p203 = scmp.ne.s32.totalorder %s192, %s195
      %p204 = scmp.eq.s32.totalorder %s36, 1
      %p205 = por %p203, %p204
      %p206 = scmp.ne.s32.totalorder %s195, %s196
      %p207 = scmp.eq.s32.totalorder %s36, 0
      %p208 = por %p206, %p207
      %p209 = scmp.ne.s32.totalorder %s195, %s196
      %p210 = scmp.eq.s32.totalorder %s37, 1
      %p211 = por %p209, %p210
      %p213 = scmp.ne.s32.totalorder %s196, %s212
      %p214 = scmp.eq.s32.totalorder %s37, 0
      %p215 = por %p213, %p214
      %s216 = ssub.s32 %s40, %s49
      %p217 = scmp.eq.s32.totalorder %s216, 0
      %s219 = sadd.s32 %s218, 1
      %s220 = scalar_select %p217, %s218, %s219
      %p223 = pneg %p217
      %p224 = scmp.eq.s32.totalorder %s31, 1
      %p225 = por %p223, %p224
      %p226 = scmp.ne.s32.totalorder %s218, %s221
      %p227 = scmp.eq.s32.totalorder %s31, 0
      %p228 = por %p226, %p227
      %p229 = scmp.ne.s32.totalorder %s218, %s221
      %p230 = scmp.eq.s32.totalorder %s36, 1
      %p231 = por %p229, %p230
      %p232 = scmp.ne.s32.totalorder %s221, %s222
      %p233 = scmp.eq.s32.totalorder %s36, 0
      %p234 = por %p232, %p233
      %p235 = scmp.ne.s32.totalorder %s221, %s222
      %p236 = scmp.eq.s32.totalorder %s37, 1
      %p237 = por %p235, %p236
      %p239 = scmp.ne.s32.totalorder %s222, %s238
      %p240 = scmp.eq.s32.totalorder %s37, 0
      %p241 = por %p239, %p240
      %s242 = ssub.s32 %s40, %s49
      %p243 = scmp.eq.s32.totalorder %s242, 0
      %s245 = sadd.s32 %s244, 1
      %s246 = scalar_select %p243, %s244, %s245
      %p249 = pneg %p243
      %p250 = scmp.eq.s32.totalorder %s31, 1
      %p251 = por %p249, %p250
      %p252 = scmp.ne.s32.totalorder %s244, %s247
      %p253 = scmp.eq.s32.totalorder %s31, 0
      %p254 = por %p252, %p253
      %p255 = scmp.ne.s32.totalorder %s244, %s247
      %p256 = scmp.eq.s32.totalorder %s36, 1
      %p257 = por %p255, %p256
      %p258 = scmp.ne.s32.totalorder %s247, %s248
      %p259 = scmp.eq.s32.totalorder %s36, 0
      %p260 = por %p258, %p259
      %p261 = scmp.ne.s32.totalorder %s247, %s248
      %p262 = scmp.eq.s32.totalorder %s37, 1
      %p263 = por %p261, %p262
      %p265 = scmp.ne.s32.totalorder %s248, %s264
      %p266 = scmp.eq.s32.totalorder %s37, 0
      %p267 = por %p265, %p266
      %s269 = sadd.s32 %s268, 1
      %p272 = scmp.eq.s32.totalorder %s31, 1
      %p273 = scmp.ne.s32.totalorder %s268, %s270
      %p274 = scmp.eq.s32.totalorder %s31, 0
      %p275 = por %p273, %p274
      %p276 = scmp.ne.s32.totalorder %s268, %s270
      %p277 = scmp.eq.s32.totalorder %s36, 1
      %p278 = por %p276, %p277
      %p279 = scmp.ne.s32.totalorder %s270, %s271
      %p280 = scmp.eq.s32.totalorder %s36, 0
      %p281 = por %p279, %p280
      %p282 = scmp.ne.s32.totalorder %s270, %s271
      %p283 = scmp.eq.s32.totalorder %s37, 1
      %p284 = por %p282, %p283
      %p286 = scmp.ne.s32.totalorder %s271, %s285
      %p287 = scmp.eq.s32.totalorder %s37, 0
      %p288 = por %p286, %p287
      %s289 = ssub.s32 %s38, %s57
      %s290 = ssub.s32 %s39, %s53
      %s291 = sor.u32 %s289, %s290
      %p292 = scmp.eq.s32.totalorder %s291, 0
      %s294 = sadd.s32 %s293, 1
      %s295 = scalar_select %p292, %s293, %s294
      %p298 = pneg %p292
      %p299 = scmp.eq.s32.totalorder %s31, 1
      %p300 = por %p298, %p299
      %p301 = scmp.ne.s32.totalorder %s293, %s296
      %p302 = scmp.eq.s32.totalorder %s31, 0
      %p303 = por %p301, %p302
      %p304 = scmp.ne.s32.totalorder %s293, %s296
      %p305 = scmp.eq.s32.totalorder %s36, 1
      %p306 = por %p304, %p305
      %p307 = scmp.ne.s32.totalorder %s296, %s297
      %p308 = scmp.eq.s32.totalorder %s36, 0
      %p309 = por %p307, %p308
      %p310 = scmp.ne.s32.totalorder %s296, %s297
      %p311 = scmp.eq.s32.totalorder %s37, 1
      %p312 = por %p310, %p311
      %p314 = scmp.ne.s32.totalorder %s297, %s313
      %p315 = scmp.eq.s32.totalorder %s37, 0
      %p316 = por %p314, %p315
      %s317 = ssub.s32 %s38, %s57
      %s318 = ssub.s32 %s40, %s49
      %s319 = sor.u32 %s317, %s318
      %s320 = ssub.s32 %s39, %s53
      %s321 = sor.u32 %s319, %s320
      %p322 = scmp.eq.s32.totalorder %s321, 0
      %s324 = sadd.s32 %s323, 1
      %s325 = scalar_select %p322, %s323, %s324
      %p328 = pneg %p322
      %p329 = scmp.eq.s32.totalorder %s31, 1
      %p330 = por %p328, %p329
      %p331 = scmp.ne.s32.totalorder %s323, %s326
      %p332 = scmp.eq.s32.totalorder %s31, 0
      %p333 = por %p331, %p332
      %p334 = scmp.ne.s32.totalorder %s323, %s326
      %p335 = scmp.eq.s32.totalorder %s36, 1
      %p336 = por %p334, %p335
      %p337 = scmp.ne.s32.totalorder %s326, %s327
      %p338 = scmp.eq.s32.totalorder %s36, 0
      %p339 = por %p337, %p338
      %p340 = scmp.ne.s32.totalorder %s326, %s327
      %p341 = scmp.eq.s32.totalorder %s37, 1
      %p342 = por %p340, %p341
      %p344 = scmp.ne.s32.totalorder %s327, %s343
      %p345 = scmp.eq.s32.totalorder %s37, 0
      %p346 = por %p344, %p345
      %p347 = scmp.le.s32.totalorder 1, %s31
      %p348 = scmp.lt.s32.totalorder %s31, 3
      %p349 = pnand %p347, %p348
      %p350 = pneg %p349
      // Predicated region
      $region9: #{tpu_custom_call.1} parent=5 // pred_check
        _
      $region10: #{tpu_custom_call.1} parent=5 // pred_check_branch
        %352 = sbr.rel (%p349) target = $region12
      $region11: #{tpu_custom_call.1} parent=5 // pred_region
        %s353 = ssub.s32 %s31, 1
        // Predicated region
        $region13: #{tpu_custom_call.1} parent=11 // pred_check
          %p354 = pneg %p130
        $region14: #{tpu_custom_call.1} parent=11 // pred_check_branch
          %356 = sbr.rel (%p354) target = $region16
        $region15: #{tpu_custom_call.1} parent=11 // pred_region
          %s357 = smul.u32 2, %s43
          %359 = vsyncadd [#allocation10], 0
          %s360 = smul.addr %s357, 8
          %s361 = scalar_lea.hbm %s2, %s360
          %s362 = sshll.u32 %s361, 4
          %s363 = int_to_ptr.hbm [resolvable:$true] %s362
          %s364 = sshll.u32 [#allocation11], 4
          %s365 = int_to_ptr.vmem [resolvable:$true] %s364
          %370 = dma.hbm_to_vmem [thread:$0]  %s363, 8192, %s365, [#allocation10], 256, 256, 16
        $region16: #{tpu_custom_call.1} parent=11 // pred_fallthru
          _
        // Predicated region
        $region17: #{tpu_custom_call.1} parent=11 // pred_check
          %p371 = pneg %p156
        $region18: #{tpu_custom_call.1} parent=11 // pred_check_branch
          %373 = sbr.rel (%p371) target = $region20
        $region19: #{tpu_custom_call.1} parent=11 // pred_region
          %s374 = smul.u32 2, %s43
          %p375 = scmp.lt.s32.totalorder %s374, 1
          %s376 = scalar_select %p375, %s374, 1
          %s377 = scalar_lea.vmem %s3, %s376
          %s378 = smul.u32 2, %s43
        $region20: #{tpu_custom_call.1} parent=11 // pred_fallthru
          _
        // Predicated region
        $region21: #{tpu_custom_call.1} parent=11 // pred_check
          %p379 = pneg %p182
        $region22: #{tpu_custom_call.1} parent=11 // pred_check_branch
          %381 = sbr.rel (%p379) target = $region24
        $region23: #{tpu_custom_call.1} parent=11 // pred_region
          %s382 = smul.u32 2, %s43
          %384 = vsyncadd [#allocation13], 0
          %s385 = smul.addr %s382, 8
          %s386 = scalar_lea.hbm %s4, %s385
          %s387 = sshll.u32 %s386, 4
          %s388 = int_to_ptr.hbm [resolvable:$true] %s387
          %s389 = sshll.u32 [#allocation12], 4
          %s390 = int_to_ptr.vmem [resolvable:$true] %s389
          %395 = dma.hbm_to_vmem [thread:$0]  %s388, 8192, %s390, [#allocation13], 256, 256, 16
        $region24: #{tpu_custom_call.1} parent=11 // pred_fallthru
          _
        // Predicated region
        $region25: #{tpu_custom_call.1} parent=11 // pred_check
          %p396 = pneg %p208
        $region26: #{tpu_custom_call.1} parent=11 // pred_check_branch
          %398 = sbr.rel (%p396) target = $region28
        $region27: #{tpu_custom_call.1} parent=11 // pred_region
          %s399 = smul.u32 2, %s43
          %401 = vsyncadd [#allocation13], 0
          %s402 = smul.addr %s399, 8
          %s403 = scalar_lea.hbm %s5, %s402
          %s404 = sshll.u32 %s403, 4
          %s405 = int_to_ptr.hbm [resolvable:$true] %s404
          %s406 = sshll.u32 [#allocation14], 4
          %s407 = int_to_ptr.vmem [resolvable:$true] %s406
          %412 = dma.hbm_to_vmem [thread:$0]  %s405, 8192, %s407, [#allocation13], 256, 256, 16
        $region28: #{tpu_custom_call.1} parent=11 // pred_fallthru
          _
        // Predicated region
        $region29: #{tpu_custom_call.1} parent=11 // pred_check
          %p413 = pneg %p234
        $region30: #{tpu_custom_call.1} parent=11 // pred_check_branch
          %415 = sbr.rel (%p413) target = $region32
        $region31: #{tpu_custom_call.1} parent=11 // pred_region
          %s416 = smul.u32 2, %s43
          %p417 = scmp.lt.s32.totalorder %s416, 1
          %s418 = scalar_select %p417, %s416, 1
          %s419 = scalar_lea.vmem %s6, %s418
          %s420 = smul.u32 2, %s43
        $region32: #{tpu_custom_call.1} parent=11 // pred_fallthru
          _
        // Predicated region
        $region33: #{tpu_custom_call.1} parent=11 // pred_check
          %p421 = pneg %p260
        $region34: #{tpu_custom_call.1} parent=11 // pred_check_branch
          %423 = sbr.rel (%p421) target = $region36
        $region35: #{tpu_custom_call.1} parent=11 // pred_region
          %s424 = smul.u32 32, %s43
          %426 = vsyncadd [#allocation16], 0
          %s427 = smul.addr %s424, 2
          %s428 = smul.addr %s427, 8
          %s429 = scalar_lea.hbm %s7, %s428
          %s430 = sshll.u32 %s429, 4
          %s431 = int_to_ptr.hbm [resolvable:$true] %s430
          %s432 = sshll.u32 [#allocation15], 4
          %s433 = int_to_ptr.vmem [resolvable:$true] %s432
          %438 = dma.hbm_to_vmem [thread:$0]  %s431, 8192, %s433, [#allocation16], 256, 256, 16
        $region36: #{tpu_custom_call.1} parent=11 // pred_fallthru
          _
        // Predicated region
        $region37: #{tpu_custom_call.1} parent=11 // pred_check
          %p439 = pneg %p281
        $region38: #{tpu_custom_call.1} parent=11 // pred_check_branch
          %441 = sbr.rel (%p439) target = $region40
        $region39: #{tpu_custom_call.1} parent=11 // pred_region
          _
        $region40: #{tpu_custom_call.1} parent=11 // pred_fallthru
          _
      $region12: #{tpu_custom_call.1} parent=5 // pred_fallthru
        _
      %p442 = scmp.lt.s32.totalorder %s31, 2
      // Predicated region
      $region41: #{tpu_custom_call.1} parent=5 // pred_check
        %p443 = pneg %p442
      $region42: #{tpu_custom_call.1} parent=5 // pred_check_branch
        %445 = sbr.rel (%p443) target = $region44
      $region43: #{tpu_custom_call.1} parent=5 // pred_region
        // Predicated region
        $region45: #{tpu_custom_call.1} parent=43 // pred_check
          %p446 = pneg %p72
        $region46: #{tpu_custom_call.1} parent=43 // pred_check_branch
          %448 = sbr.rel (%p446) target = $region48
        $region47: #{tpu_custom_call.1} parent=43 // pred_region
          %s449 = sand.u32 %s62, 1
          %s450 = scalar_lea.sflag [#allocation7], %s449
          %s451 = sand.u32 %s62, 1
          %s452 = smul.addr %s451, 16
          %s453 = scalar_lea.vmem [#allocation6], %s452
          %455 = vsyncadd %s450, 0
          %s456 = smul.addr %s39, 2
          %s457 = smul.addr %s38, 2
          %s458 = sadd.s32 %s456, %s457
          %s459 = smul.addr %s458, 8
          %s460 = scalar_lea.hbm %s0, %s459
          %s462 = sshll.u32 %s460, 4
          %s463 = int_to_ptr.hbm [resolvable:$true] %s462
          %s464 = sshll.u32 %s453, 4
          %s465 = int_to_ptr.vmem [resolvable:$true] %s464
          %467 = dma.hbm_to_vmem [thread:$0]  %s463, 256, %s465, %s450
        $region48: #{tpu_custom_call.1} parent=43 // pred_fallthru
          _
        // Predicated region
        $region49: #{tpu_custom_call.1} parent=43 // pred_check
          %p468 = pneg %p98
        $region50: #{tpu_custom_call.1} parent=43 // pred_check_branch
          %470 = sbr.rel (%p468) target = $region52
        $region51: #{tpu_custom_call.1} parent=43 // pred_region
          %s471 = sand.u32 %s31, 1
          %s472 = scalar_lea.sflag [#allocation10], %s471
          %s473 = sand.u32 %s88, 1
          %s474 = smul.addr %s473, 16
          %s475 = scalar_lea.vmem [#allocation9], %s474
          %477 = vsyncadd %s472, 0
          %s478 = smul.addr %s38, 2
          %s479 = smul.addr %s478, 8
          %s480 = scalar_lea.hbm %s1, %s479
          %s482 = sshll.u32 %s480, 4
          %s483 = int_to_ptr.hbm [resolvable:$true] %s482
          %s484 = sshll.u32 %s475, 4
          %s485 = int_to_ptr.vmem [resolvable:$true] %s484
          %487 = dma.hbm_to_vmem [thread:$0]  %s483, 256, %s485, %s472
        $region52: #{tpu_custom_call.1} parent=43 // pred_fallthru
          _
      $region44: #{tpu_custom_call.1} parent=5 // pred_fallthru
        _
      %p488 = scmp.le.s32.totalorder 1, %s31
      %p489 = scmp.lt.s32.totalorder %s31, 3
      %p490 = pnand %p488, %p489
      %p491 = pneg %p490
      // Predicated region
      $region53: #{tpu_custom_call.1} parent=5 // pred_check
        _
      $region54: #{tpu_custom_call.1} parent=5 // pred_check_branch
        %493 = sbr.rel (%p490) target = $region56
      $region55: #{tpu_custom_call.1} parent=5 // pred_region
        %s494 = ssub.s32 %s31, 1
        %s495 = sand.u32 %s65, 1
        %s496 = scalar_lea.sflag [#allocation7], %s495
        %s497 = sand.u32 %s65, 1
        %s498 = smul.addr %s497, 16
        %s499 = scalar_lea.vmem [#allocation6], %s498
        // Predicated region
        $region57: #{tpu_custom_call.1} parent=55 // pred_check
          %p500 = pneg %p78
        $region58: #{tpu_custom_call.1} parent=55 // pred_check_branch
          %502 = sbr.rel (%p500) target = $region60
        $region59: #{tpu_custom_call.1} parent=55 // pred_region
          %504 = dma.done %s496, 256
        $region60: #{tpu_custom_call.1} parent=55 // pred_fallthru
          _
        %s505 = sand.u32 %s36, 1
        %s506 = scalar_lea.sflag [#allocation10], %s505
        %s507 = sand.u32 %s91, 1
        %s508 = smul.addr %s507, 16
        %s509 = scalar_lea.vmem [#allocation9], %s508
        // Predicated region
        $region61: #{tpu_custom_call.1} parent=55 // pred_check
          %p510 = pneg %p104
        $region62: #{tpu_custom_call.1} parent=55 // pred_check_branch
          %512 = sbr.rel (%p510) target = $region64
        $region63: #{tpu_custom_call.1} parent=55 // pred_region
          %514 = dma.done %s506, 256
        $region64: #{tpu_custom_call.1} parent=55 // pred_fallthru
          _
        // Predicated region
        $region65: #{tpu_custom_call.1} parent=55 // pred_check
          %p515 = pneg %p130
        $region66: #{tpu_custom_call.1} parent=55 // pred_check_branch
          %517 = sbr.rel (%p515) target = $region68
        $region67: #{tpu_custom_call.1} parent=55 // pred_region
          %519 = dma.done [#allocation10], 8192
        $region68: #{tpu_custom_call.1} parent=55 // pred_fallthru
          _
        // Predicated region
        $region69: #{tpu_custom_call.1} parent=55 // pred_check
          %p520 = pneg %p182
        $region70: #{tpu_custom_call.1} parent=55 // pred_check_branch
          %522 = sbr.rel (%p520) target = $region72
        $region71: #{tpu_custom_call.1} parent=55 // pred_region
          %524 = dma.done [#allocation13], 8192
        $region72: #{tpu_custom_call.1} parent=55 // pred_fallthru
          _
        // Predicated region
        $region73: #{tpu_custom_call.1} parent=55 // pred_check
          %p525 = pneg %p208
        $region74: #{tpu_custom_call.1} parent=55 // pred_check_branch
          %527 = sbr.rel (%p525) target = $region76
        $region75: #{tpu_custom_call.1} parent=55 // pred_region
          %529 = dma.done [#allocation13], 8192
        $region76: #{tpu_custom_call.1} parent=55 // pred_fallthru
          _
        // Predicated region
        $region77: #{tpu_custom_call.1} parent=55 // pred_check
          %p530 = pneg %p260
        $region78: #{tpu_custom_call.1} parent=55 // pred_check_branch
          %532 = sbr.rel (%p530) target = $region80
        $region79: #{tpu_custom_call.1} parent=55 // pred_region
          %534 = dma.done [#allocation16], 8192
        $region80: #{tpu_custom_call.1} parent=55 // pred_fallthru
          _
        %s535 = sand.u32 %s65, 1
        %s536 = scalar_lea.sflag [#allocation7], %s535
        %s537 = sand.u32 %s65, 1
        %s538 = smul.addr %s537, 16
        %s539 = scalar_lea.vmem [#allocation6], %s538
        %p540 = pneg %p78
        %p541 = pneg %p75
        %s542 = sand.u32 %s36, 1
        %s543 = scalar_lea.sflag [#allocation10], %s542
        %s544 = sand.u32 %s91, 1
        %s545 = smul.addr %s544, 16
        %s546 = scalar_lea.vmem [#allocation9], %s545
        %p547 = pneg %p104
        %p548 = pneg %p101
        %p549 = pneg %p130
        %p550 = pneg %p127
        %s551 = smul.u32 2, %s43
        %p552 = scmp.lt.s32.totalorder %s551, 1
        %s553 = scalar_select %p552, %s551, 1
        %s554 = scalar_lea.vmem %s3, %s553
        %p555 = pneg %p156
        %p556 = pneg %p153
        %p557 = pneg %p182
        %p558 = pneg %p179
        %p559 = pneg %p208
        %p560 = pneg %p205
        %s561 = smul.u32 2, %s43
        %p562 = scmp.lt.s32.totalorder %s561, 1
        %s563 = scalar_select %p562, %s561, 1
        %s564 = scalar_lea.vmem %s6, %s563
        %p565 = pneg %p234
        %p566 = pneg %p231
        %p567 = pneg %p260
        %p568 = pneg %p257
        %p569 = pneg %p281
        %p570 = pneg %p278
        %p571 = pneg %p309
        %p572 = pneg %p306
        %s573 = sand.u32 %s296, 1
        %s574 = scalar_lea.sflag [#allocation8], %s573
        %s575 = sand.u32 %s296, 1
        %s576 = smul.addr %s575, 16
        %s577 = scalar_lea.vmem [#allocation17], %s576
        %p578 = pneg %p339
        %p579 = pneg %p336
        %s580 = sand.u32 %s326, 1
        %s581 = scalar_lea.sflag [#allocation19], %s580
        %s582 = sand.u32 %s326, 1
        %s583 = smul.addr %s582, 32
        %s584 = scalar_lea.vmem [#allocation18], %s583
        %s585 = smul.u32 2, %s43
        %s586 = smul.u32 2, %s43
        %p587 = scmp.lt.s32.totalorder %s586, 1
        %s588 = scalar_select %p587, %s586, 1
        %s589 = scalar_lea.vmem %s3, %s588
        %s590 = smul.u32 2, %s43
        %s591 = smul.u32 2, %s43
        %s592 = smul.u32 2, %s43
        %s593 = smul.u32 2, %s43
        %p594 = scmp.lt.s32.totalorder %s593, 1
        %s595 = scalar_select %p594, %s593, 1
        %s596 = scalar_lea.vmem %s6, %s595
        %s597 = smul.u32 2, %s43
        %s598 = smul.u32 32, %s43
        %s599 = smul.u32 4, %s43
        %p600 = scmp.eq.s32.totalorder %s42, 0
        // Predicated region
        $region81: #{tpu_custom_call.1} parent=55 // pred_check
          %p601 = pneg %p600
        $region82: #{tpu_custom_call.1} parent=55 // pred_check_branch
          %603 = sbr.rel (%p601) target = $region84
        $region83: #{tpu_custom_call.1} parent=55 // pred_region
          %v604 = vld [vmem:[%s509] sm:$0xff]
          %v605 = vld [vmem:[%s509 + $0x8] sm:$0xff]
          %v606 = vld [vmem:[#allocation12] sm:$0xff]
          %v607 = vld [vmem:[#allocation12 + $0x8] sm:$0xff]
          %v608 = vld [vmem:[#allocation12 + $0x10] sm:$0xff]
          %v609 = vld [vmem:[#allocation12 + $0x18] sm:$0xff]
          %v610 = vld [vmem:[#allocation12 + $0x20] sm:$0xff]
          %v611 = vld [vmem:[#allocation12 + $0x28] sm:$0xff]
          %v612 = vld [vmem:[#allocation12 + $0x30] sm:$0xff]
          %v613 = vld [vmem:[#allocation12 + $0x38] sm:$0xff]
          %v614 = vld [vmem:[#allocation12 + $0x40] sm:$0xff]
          %v615 = vld [vmem:[#allocation12 + $0x48] sm:$0xff]
          %v616 = vld [vmem:[#allocation12 + $0x50] sm:$0xff]
          %v617 = vld [vmem:[#allocation12 + $0x58] sm:$0xff]
          %v618 = vld [vmem:[#allocation12 + $0x60] sm:$0xff]
          %v619 = vld [vmem:[#allocation12 + $0x68] sm:$0xff]
          %v620 = vld [vmem:[#allocation12 + $0x70] sm:$0xff]
          %v621 = vld [vmem:[#allocation12 + $0x78] sm:$0xff]
          %v622 = vld [vmem:[#allocation12 + $0x80] sm:$0xff]
          %v623 = vld [vmem:[#allocation12 + $0x88] sm:$0xff]
          %v624 = vld [vmem:[#allocation12 + $0x90] sm:$0xff]
          %v625 = vld [vmem:[#allocation12 + $0x98] sm:$0xff]
          %v626 = vld [vmem:[#allocation12 + $0xa0] sm:$0xff]
          %v627 = vld [vmem:[#allocation12 + $0xa8] sm:$0xff]
          %v628 = vld [vmem:[#allocation12 + $0xb0] sm:$0xff]
          %v629 = vld [vmem:[#allocation12 + $0xb8] sm:$0xff]
          %v630 = vld [vmem:[#allocation12 + $0xc0] sm:$0xff]
          %v631 = vld [vmem:[#allocation12 + $0xc8] sm:$0xff]
          %v632 = vld [vmem:[#allocation12 + $0xd0] sm:$0xff]
          %v633 = vld [vmem:[#allocation12 + $0xd8] sm:$0xff]
          %v634 = vld [vmem:[#allocation12 + $0xe0] sm:$0xff]
          %v635 = vld [vmem:[#allocation12 + $0xe8] sm:$0xff]
          %v636 = vld [vmem:[#allocation12 + $0xf0] sm:$0xff]
          %v637 = vld [vmem:[#allocation12 + $0xf8] sm:$0xff]
          %v638 = vld [vmem:[#allocation12 + $0x100] sm:$0xff]
          %v639 = vld [vmem:[#allocation12 + $0x108] sm:$0xff]
          %v640 = vld [vmem:[#allocation12 + $0x110] sm:$0xff]
          %v641 = vld [vmem:[#allocation12 + $0x118] sm:$0xff]
          %v642 = vld [vmem:[#allocation12 + $0x120] sm:$0xff]
          %v643 = vld [vmem:[#allocation12 + $0x128] sm:$0xff]
          %v644 = vld [vmem:[#allocation12 + $0x130] sm:$0xff]
          %v645 = vld [vmem:[#allocation12 + $0x138] sm:$0xff]
          %v646 = vld [vmem:[#allocation12 + $0x140] sm:$0xff]
          %v647 = vld [vmem:[#allocation12 + $0x148] sm:$0xff]
          %v648 = vld [vmem:[#allocation12 + $0x150] sm:$0xff]
          %v649 = vld [vmem:[#allocation12 + $0x158] sm:$0xff]
          %v650 = vld [vmem:[#allocation12 + $0x160] sm:$0xff]
          %v651 = vld [vmem:[#allocation12 + $0x168] sm:$0xff]
          %v652 = vld [vmem:[#allocation12 + $0x170] sm:$0xff]
          %v653 = vld [vmem:[#allocation12 + $0x178] sm:$0xff]
          %v654 = vld [vmem:[#allocation12 + $0x180] sm:$0xff]
          %v655 = vld [vmem:[#allocation12 + $0x188] sm:$0xff]
          %v656 = vld [vmem:[#allocation12 + $0x190] sm:$0xff]
          %v657 = vld [vmem:[#allocation12 + $0x198] sm:$0xff]
          %v658 = vld [vmem:[#allocation12 + $0x1a0] sm:$0xff]
          %v659 = vld [vmem:[#allocation12 + $0x1a8] sm:$0xff]
          %v660 = vld [vmem:[#allocation12 + $0x1b0] sm:$0xff]
          %v661 = vld [vmem:[#allocation12 + $0x1b8] sm:$0xff]
          %v662 = vld [vmem:[#allocation12 + $0x1c0] sm:$0xff]
          %v663 = vld [vmem:[#allocation12 + $0x1c8] sm:$0xff]
          %v664 = vld [vmem:[#allocation12 + $0x1d0] sm:$0xff]
          %v665 = vld [vmem:[#allocation12 + $0x1d8] sm:$0xff]
          %v666 = vld [vmem:[#allocation12 + $0x1e0] sm:$0xff]
          %v667 = vld [vmem:[#allocation12 + $0x1e8] sm:$0xff]
          %v668 = vld [vmem:[#allocation12 + $0x1f0] sm:$0xff]
          %v669 = vld [vmem:[#allocation12 + $0x1f8] sm:$0xff]
          %670 = vmatpush.msra.mxu0 %v636
          %671 = vmatpush.msra.mxu0 %v634
          %672 = vmatpush.msra.mxu0 %v632
          %673 = vmatpush.msra.mxu0 %v630
          %674 = vmatpush.msra.mxu0 %v628
          %675 = vmatpush.msra.mxu0 %v626
          %676 = vmatpush.msra.mxu0 %v624
          %677 = vmatpush.msra.mxu0 %v622
          %678 = vmatpush.msra.mxu0 %v620
          %679 = vmatpush.msra.mxu0 %v618
          %680 = vmatpush.msra.mxu0 %v616
          %681 = vmatpush.msra.mxu0 %v614
          %682 = vmatpush.msra.mxu0 %v612
          %683 = vmatpush.msra.mxu0 %v610
          %684 = vmatpush.msra.mxu0 %v608
          %685 = vmatpush.msra.mxu0 %v606
          %686 = vmatmul.f32.gmra.mxu0 %v604
          %v687 = vpop.f32.mrf.mxu0
          %v688 = vadd.f32 0.0, %v687
          %689 = vdwg.mxu0
          %690 = vmatpush.msra.mxu0 %v668
          %691 = vmatpush.msra.mxu0 %v666
          %692 = vmatpush.msra.mxu0 %v664
          %693 = vmatpush.msra.mxu0 %v662
          %694 = vmatpush.msra.mxu0 %v660
          %695 = vmatpush.msra.mxu0 %v658
          %696 = vmatpush.msra.mxu0 %v656
          %697 = vmatpush.msra.mxu0 %v654
          %698 = vmatpush.msra.mxu0 %v652
          %699 = vmatpush.msra.mxu0 %v650
          %700 = vmatpush.msra.mxu0 %v648
          %701 = vmatpush.msra.mxu0 %v646
          %702 = vmatpush.msra.mxu0 %v644
          %703 = vmatpush.msra.mxu0 %v642
          %704 = vmatpush.msra.mxu0 %v640
          %705 = vmatpush.msra.mxu0 %v638
          %706 = vmatmul.f32.gmra.mxu0 %v605
          %v707 = vpop.f32.mrf.mxu0
          %v708 = vadd.f32 %v688, %v707
          %709 = vdwg.mxu0
          %710 = vmatpush.msra.mxu0 %v637
          %711 = vmatpush.msra.mxu0 %v635
          %712 = vmatpush.msra.mxu0 %v633
          %713 = vmatpush.msra.mxu0 %v631
          %714 = vmatpush.msra.mxu0 %v629
          %715 = vmatpush.msra.mxu0 %v627
          %716 = vmatpush.msra.mxu0 %v625
          %717 = vmatpush.msra.mxu0 %v623
          %718 = vmatpush.msra.mxu0 %v621
          %719 = vmatpush.msra.mxu0 %v619
          %720 = vmatpush.msra.mxu0 %v617
          %721 = vmatpush.msra.mxu0 %v615
          %722 = vmatpush.msra.mxu0 %v613
          %723 = vmatpush.msra.mxu0 %v611
          %724 = vmatpush.msra.mxu0 %v609
          %725 = vmatpush.msra.mxu0 %v607
          %726 = vmatmul.f32.gmra.mxu0 %v604
          %v727 = vpop.f32.mrf.mxu0
          %v728 = vadd.f32 0.0, %v727
          %729 = vdwg.mxu0
          %730 = vmatpush.msra.mxu0 %v669
          %731 = vmatpush.msra.mxu0 %v667
          %732 = vmatpush.msra.mxu0 %v665
          %733 = vmatpush.msra.mxu0 %v663
          %734 = vmatpush.msra.mxu0 %v661
          %735 = vmatpush.msra.mxu0 %v659
          %736 = vmatpush.msra.mxu0 %v657
          %737 = vmatpush.msra.mxu0 %v655
          %738 = vmatpush.msra.mxu0 %v653
          %739 = vmatpush.msra.mxu0 %v651
          %740 = vmatpush.msra.mxu0 %v649
          %741 = vmatpush.msra.mxu0 %v647
          %742 = vmatpush.msra.mxu0 %v645
          %743 = vmatpush.msra.mxu0 %v643
          %744 = vmatpush.msra.mxu0 %v641
          %745 = vmatpush.msra.mxu0 %v639
          %746 = vmatmul.f32.gmra.mxu0 %v605
          %v747 = vpop.f32.mrf.mxu0
          %v748 = vadd.f32 %v728, %v747
          %749 = vdwg.mxu0
          %s750 = smul.u32 %s43, 2
          %s751 = smul.addr %s750, 8
          %s752 = scalar_lea.vmem [#allocation4], %s751
          %753 = vst [vmem:[%s752] sm:$0xff] %v708
          %754 = vst [vmem:[%s752 + $0x8] sm:$0xff] %v748
          %v755 = vld [vmem:[#allocation14] sm:$0xff]
          %v756 = vld [vmem:[#allocation14 + $0x8] sm:$0xff]
          %v757 = vld [vmem:[#allocation14 + $0x10] sm:$0xff]
          %v758 = vld [vmem:[#allocation14 + $0x18] sm:$0xff]
          %v759 = vld [vmem:[#allocation14 + $0x20] sm:$0xff]
          %v760 = vld [vmem:[#allocation14 + $0x28] sm:$0xff]
          %v761 = vld [vmem:[#allocation14 + $0x30] sm:$0xff]
          %v762 = vld [vmem:[#allocation14 + $0x38] sm:$0xff]
          %v763 = vld [vmem:[#allocation14 + $0x40] sm:$0xff]
          %v764 = vld [vmem:[#allocation14 + $0x48] sm:$0xff]
          %v765 = vld [vmem:[#allocation14 + $0x50] sm:$0xff]
          %v766 = vld [vmem:[#allocation14 + $0x58] sm:$0xff]
          %v767 = vld [vmem:[#allocation14 + $0x60] sm:$0xff]
          %v768 = vld [vmem:[#allocation14 + $0x68] sm:$0xff]
          %v769 = vld [vmem:[#allocation14 + $0x70] sm:$0xff]
          %v770 = vld [vmem:[#allocation14 + $0x78] sm:$0xff]
          %v771 = vld [vmem:[#allocation14 + $0x80] sm:$0xff]
          %v772 = vld [vmem:[#allocation14 + $0x88] sm:$0xff]
          %v773 = vld [vmem:[#allocation14 + $0x90] sm:$0xff]
          %v774 = vld [vmem:[#allocation14 + $0x98] sm:$0xff]
          %v775 = vld [vmem:[#allocation14 + $0xa0] sm:$0xff]
          %v776 = vld [vmem:[#allocation14 + $0xa8] sm:$0xff]
          %v777 = vld [vmem:[#allocation14 + $0xb0] sm:$0xff]
          %v778 = vld [vmem:[#allocation14 + $0xb8] sm:$0xff]
          %v779 = vld [vmem:[#allocation14 + $0xc0] sm:$0xff]
          %v780 = vld [vmem:[#allocation14 + $0xc8] sm:$0xff]
          %v781 = vld [vmem:[#allocation14 + $0xd0] sm:$0xff]
          %v782 = vld [vmem:[#allocation14 + $0xd8] sm:$0xff]
          %v783 = vld [vmem:[#allocation14 + $0xe0] sm:$0xff]
          %v784 = vld [vmem:[#allocation14 + $0xe8] sm:$0xff]
          %v785 = vld [vmem:[#allocation14 + $0xf0] sm:$0xff]
          %v786 = vld [vmem:[#allocation14 + $0xf8] sm:$0xff]
          %v787 = vld [vmem:[#allocation14 + $0x100] sm:$0xff]
          %v788 = vld [vmem:[#allocation14 + $0x108] sm:$0xff]
          %v789 = vld [vmem:[#allocation14 + $0x110] sm:$0xff]
          %v790 = vld [vmem:[#allocation14 + $0x118] sm:$0xff]
          %v791 = vld [vmem:[#allocation14 + $0x120] sm:$0xff]
          %v792 = vld [vmem:[#allocation14 + $0x128] sm:$0xff]
          %v793 = vld [vmem:[#allocation14 + $0x130] sm:$0xff]
          %v794 = vld [vmem:[#allocation14 + $0x138] sm:$0xff]
          %v795 = vld [vmem:[#allocation14 + $0x140] sm:$0xff]
          %v796 = vld [vmem:[#allocation14 + $0x148] sm:$0xff]
          %v797 = vld [vmem:[#allocation14 + $0x150] sm:$0xff]
          %v798 = vld [vmem:[#allocation14 + $0x158] sm:$0xff]
          %v799 = vld [vmem:[#allocation14 + $0x160] sm:$0xff]
          %v800 = vld [vmem:[#allocation14 + $0x168] sm:$0xff]
          %v801 = vld [vmem:[#allocation14 + $0x170] sm:$0xff]
          %v802 = vld [vmem:[#allocation14 + $0x178] sm:$0xff]
          %v803 = vld [vmem:[#allocation14 + $0x180] sm:$0xff]
          %v804 = vld [vmem:[#allocation14 + $0x188] sm:$0xff]
          %v805 = vld [vmem:[#allocation14 + $0x190] sm:$0xff]
          %v806 = vld [vmem:[#allocation14 + $0x198] sm:$0xff]
          %v807 = vld [vmem:[#allocation14 + $0x1a0] sm:$0xff]
          %v808 = vld [vmem:[#allocation14 + $0x1a8] sm:$0xff]
          %v809 = vld [vmem:[#allocation14 + $0x1b0] sm:$0xff]
          %v810 = vld [vmem:[#allocation14 + $0x1b8] sm:$0xff]
          %v811 = vld [vmem:[#allocation14 + $0x1c0] sm:$0xff]
          %v812 = vld [vmem:[#allocation14 + $0x1c8] sm:$0xff]
          %v813 = vld [vmem:[#allocation14 + $0x1d0] sm:$0xff]
          %v814 = vld [vmem:[#allocation14 + $0x1d8] sm:$0xff]
          %v815 = vld [vmem:[#allocation14 + $0x1e0] sm:$0xff]
          %v816 = vld [vmem:[#allocation14 + $0x1e8] sm:$0xff]
          %v817 = vld [vmem:[#allocation14 + $0x1f0] sm:$0xff]
          %v818 = vld [vmem:[#allocation14 + $0x1f8] sm:$0xff]
          %v819 = vld [vmem:[%s596] sm:$0x3]
          %v821 = vperm.slane %v819, 0
          %v822 = vperm.slane %v819, 1
          %825 = vmatpush.msra.mxu0 %v785
          %826 = vmatpush.msra.mxu0 %v783
          %827 = vmatpush.msra.mxu0 %v781
          %828 = vmatpush.msra.mxu0 %v779
          %829 = vmatpush.msra.mxu0 %v777
          %830 = vmatpush.msra.mxu0 %v775
          %831 = vmatpush.msra.mxu0 %v773
          %832 = vmatpush.msra.mxu0 %v771
          %833 = vmatpush.msra.mxu0 %v769
          %834 = vmatpush.msra.mxu0 %v767
          %835 = vmatpush.msra.mxu0 %v765
          %836 = vmatpush.msra.mxu0 %v763
          %837 = vmatpush.msra.mxu0 %v761
          %838 = vmatpush.msra.mxu0 %v759
          %839 = vmatpush.msra.mxu0 %v757
          %840 = vmatpush.msra.mxu0 %v755
          %841 = vmatmul.f32.gmra.mxu0 %v604
          %v842 = vpop.f32.mrf.mxu0
          %v843 = vadd.f32 %v821, %v842
          %844 = vdwg.mxu0
          %845 = vmatpush.msra.mxu0 %v817
          %846 = vmatpush.msra.mxu0 %v815
          %847 = vmatpush.msra.mxu0 %v813
          %848 = vmatpush.msra.mxu0 %v811
          %849 = vmatpush.msra.mxu0 %v809
          %850 = vmatpush.msra.mxu0 %v807
          %851 = vmatpush.msra.mxu0 %v805
          %852 = vmatpush.msra.mxu0 %v803
          %853 = vmatpush.msra.mxu0 %v801
          %854 = vmatpush.msra.mxu0 %v799
          %855 = vmatpush.msra.mxu0 %v797
          %856 = vmatpush.msra.mxu0 %v795
          %857 = vmatpush.msra.mxu0 %v793
          %858 = vmatpush.msra.mxu0 %v791
          %859 = vmatpush.msra.mxu0 %v789
          %860 = vmatpush.msra.mxu0 %v787
          %861 = vmatmul.f32.gmra.mxu0 %v605
          %v862 = vpop.f32.mrf.mxu0
          %v863 = vadd.f32 %v843, %v862
          %864 = vdwg.mxu0
          %865 = vmatpush.msra.mxu0 %v786
          %866 = vmatpush.msra.mxu0 %v784
          %867 = vmatpush.msra.mxu0 %v782
          %868 = vmatpush.msra.mxu0 %v780
          %869 = vmatpush.msra.mxu0 %v778
          %870 = vmatpush.msra.mxu0 %v776
          %871 = vmatpush.msra.mxu0 %v774
          %872 = vmatpush.msra.mxu0 %v772
          %873 = vmatpush.msra.mxu0 %v770
          %874 = vmatpush.msra.mxu0 %v768
          %875 = vmatpush.msra.mxu0 %v766
          %876 = vmatpush.msra.mxu0 %v764
          %877 = vmatpush.msra.mxu0 %v762
          %878 = vmatpush.msra.mxu0 %v760
          %879 = vmatpush.msra.mxu0 %v758
          %880 = vmatpush.msra.mxu0 %v756
          %881 = vmatmul.f32.gmra.mxu0 %v604
          %v882 = vpop.f32.mrf.mxu0
          %v883 = vadd.f32 %v822, %v882
          %884 = vdwg.mxu0
          %885 = vmatpush.msra.mxu0 %v818
          %886 = vmatpush.msra.mxu0 %v816
          %887 = vmatpush.msra.mxu0 %v814
          %888 = vmatpush.msra.mxu0 %v812
          %889 = vmatpush.msra.mxu0 %v810
          %890 = vmatpush.msra.mxu0 %v808
          %891 = vmatpush.msra.mxu0 %v806
          %892 = vmatpush.msra.mxu0 %v804
          %893 = vmatpush.msra.mxu0 %v802
          %894 = vmatpush.msra.mxu0 %v800
          %895 = vmatpush.msra.mxu0 %v798
          %896 = vmatpush.msra.mxu0 %v796
          %897 = vmatpush.msra.mxu0 %v794
          %898 = vmatpush.msra.mxu0 %v792
          %899 = vmatpush.msra.mxu0 %v790
          %900 = vmatpush.msra.mxu0 %v788
          %901 = vmatmul.f32.gmra.mxu0 %v605
          %v902 = vpop.f32.mrf.mxu0
          %v903 = vadd.f32 %v883, %v902
          %904 = vdwg.mxu0
          %s905 = smul.addr %s750, 8
          %s906 = scalar_lea.vmem [#allocation5], %s905
          %907 = vst [vmem:[%s906] sm:$0xff] %v863
          %908 = vst [vmem:[%s906 + $0x8] sm:$0xff] %v903
        $region84: #{tpu_custom_call.1} parent=55 // pred_fallthru
          _
        %v909 = vld [vmem:[%s499] sm:$0xff]
        %v910 = vld [vmem:[%s499 + $0x8] sm:$0xff]
        %v911 = vld [vmem:[#allocation11] sm:$0xff]
        %v912 = vld [vmem:[#allocation11 + $0x8] sm:$0xff]
        %v913 = vld [vmem:[#allocation11 + $0x10] sm:$0xff]
        %v914 = vld [vmem:[#allocation11 + $0x18] sm:$0xff]
        %v915 = vld [vmem:[#allocation11 + $0x20] sm:$0xff]
        %v916 = vld [vmem:[#allocation11 + $0x28] sm:$0xff]
        %v917 = vld [vmem:[#allocation11 + $0x30] sm:$0xff]
        %v918 = vld [vmem:[#allocation11 + $0x38] sm:$0xff]
        %v919 = vld [vmem:[#allocation11 + $0x40] sm:$0xff]
        %v920 = vld [vmem:[#allocation11 + $0x48] sm:$0xff]
        %v921 = vld [vmem:[#allocation11 + $0x50] sm:$0xff]
        %v922 = vld [vmem:[#allocation11 + $0x58] sm:$0xff]
        %v923 = vld [vmem:[#allocation11 + $0x60] sm:$0xff]
        %v924 = vld [vmem:[#allocation11 + $0x68] sm:$0xff]
        %v925 = vld [vmem:[#allocation11 + $0x70] sm:$0xff]
        %v926 = vld [vmem:[#allocation11 + $0x78] sm:$0xff]
        %v927 = vld [vmem:[#allocation11 + $0x80] sm:$0xff]
        %v928 = vld [vmem:[#allocation11 + $0x88] sm:$0xff]
        %v929 = vld [vmem:[#allocation11 + $0x90] sm:$0xff]
        %v930 = vld [vmem:[#allocation11 + $0x98] sm:$0xff]
        %v931 = vld [vmem:[#allocation11 + $0xa0] sm:$0xff]
        %v932 = vld [vmem:[#allocation11 + $0xa8] sm:$0xff]
        %v933 = vld [vmem:[#allocation11 + $0xb0] sm:$0xff]
        %v934 = vld [vmem:[#allocation11 + $0xb8] sm:$0xff]
        %v935 = vld [vmem:[#allocation11 + $0xc0] sm:$0xff]
        %v936 = vld [vmem:[#allocation11 + $0xc8] sm:$0xff]
        %v937 = vld [vmem:[#allocation11 + $0xd0] sm:$0xff]
        %v938 = vld [vmem:[#allocation11 + $0xd8] sm:$0xff]
        %v939 = vld [vmem:[#allocation11 + $0xe0] sm:$0xff]
        %v940 = vld [vmem:[#allocation11 + $0xe8] sm:$0xff]
        %v941 = vld [vmem:[#allocation11 + $0xf0] sm:$0xff]
        %v942 = vld [vmem:[#allocation11 + $0xf8] sm:$0xff]
        %v943 = vld [vmem:[#allocation11 + $0x100] sm:$0xff]
        %v944 = vld [vmem:[#allocation11 + $0x108] sm:$0xff]
        %v945 = vld [vmem:[#allocation11 + $0x110] sm:$0xff]
        %v946 = vld [vmem:[#allocation11 + $0x118] sm:$0xff]
        %v947 = vld [vmem:[#allocation11 + $0x120] sm:$0xff]
        %v948 = vld [vmem:[#allocation11 + $0x128] sm:$0xff]
        %v949 = vld [vmem:[#allocation11 + $0x130] sm:$0xff]
        %v950 = vld [vmem:[#allocation11 + $0x138] sm:$0xff]
        %v951 = vld [vmem:[#allocation11 + $0x140] sm:$0xff]
        %v952 = vld [vmem:[#allocation11 + $0x148] sm:$0xff]
        %v953 = vld [vmem:[#allocation11 + $0x150] sm:$0xff]
        %v954 = vld [vmem:[#allocation11 + $0x158] sm:$0xff]
        %v955 = vld [vmem:[#allocation11 + $0x160] sm:$0xff]
        %v956 = vld [vmem:[#allocation11 + $0x168] sm:$0xff]
        %v957 = vld [vmem:[#allocation11 + $0x170] sm:$0xff]
        %v958 = vld [vmem:[#allocation11 + $0x178] sm:$0xff]
        %v959 = vld [vmem:[#allocation11 + $0x180] sm:$0xff]
        %v960 = vld [vmem:[#allocation11 + $0x188] sm:$0xff]
        %v961 = vld [vmem:[#allocation11 + $0x190] sm:$0xff]
        %v962 = vld [vmem:[#allocation11 + $0x198] sm:$0xff]
        %v963 = vld [vmem:[#allocation11 + $0x1a0] sm:$0xff]
        %v964 = vld [vmem:[#allocation11 + $0x1a8] sm:$0xff]
        %v965 = vld [vmem:[#allocation11 + $0x1b0] sm:$0xff]
        %v966 = vld [vmem:[#allocation11 + $0x1b8] sm:$0xff]
        %v967 = vld [vmem:[#allocation11 + $0x1c0] sm:$0xff]
        %v968 = vld [vmem:[#allocation11 + $0x1c8] sm:$0xff]
        %v969 = vld [vmem:[#allocation11 + $0x1d0] sm:$0xff]
        %v970 = vld [vmem:[#allocation11 + $0x1d8] sm:$0xff]
        %v971 = vld [vmem:[#allocation11 + $0x1e0] sm:$0xff]
        %v972 = vld [vmem:[#allocation11 + $0x1e8] sm:$0xff]
        %v973 = vld [vmem:[#allocation11 + $0x1f0] sm:$0xff]
        %v974 = vld [vmem:[#allocation11 + $0x1f8] sm:$0xff]
        %v975 = vld [vmem:[%s589] sm:$0x3]
        %v977 = vperm.slane %v975, 0
        %v978 = vperm.slane %v975, 1
        %981 = vmatpush.msra.mxu0 %v941
        %982 = vmatpush.msra.mxu0 %v939
        %983 = vmatpush.msra.mxu0 %v937
        %984 = vmatpush.msra.mxu0 %v935
        %985 = vmatpush.msra.mxu0 %v933
        %986 = vmatpush.msra.mxu0 %v931
        %987 = vmatpush.msra.mxu0 %v929
        %988 = vmatpush.msra.mxu0 %v927
        %989 = vmatpush.msra.mxu0 %v925
        %990 = vmatpush.msra.mxu0 %v923
        %991 = vmatpush.msra.mxu0 %v921
        %992 = vmatpush.msra.mxu0 %v919
        %993 = vmatpush.msra.mxu0 %v917
        %994 = vmatpush.msra.mxu0 %v915
        %995 = vmatpush.msra.mxu0 %v913
        %996 = vmatpush.msra.mxu0 %v911
        %997 = vmatmul.f32.gmra.mxu0 %v909
        %v998 = vpop.f32.mrf.mxu0
        %v999 = vadd.f32 %v977, %v998
        %1000 = vdwg.mxu0
        %1001 = vmatpush.msra.mxu0 %v973
        %1002 = vmatpush.msra.mxu0 %v971
        %1003 = vmatpush.msra.mxu0 %v969
        %1004 = vmatpush.msra.mxu0 %v967
        %1005 = vmatpush.msra.mxu0 %v965
        %1006 = vmatpush.msra.mxu0 %v963
        %1007 = vmatpush.msra.mxu0 %v961
        %1008 = vmatpush.msra.mxu0 %v959
        %1009 = vmatpush.msra.mxu0 %v957
        %1010 = vmatpush.msra.mxu0 %v955
        %1011 = vmatpush.msra.mxu0 %v953
        %1012 = vmatpush.msra.mxu0 %v951
        %1013 = vmatpush.msra.mxu0 %v949
        %1014 = vmatpush.msra.mxu0 %v947
        %1015 = vmatpush.msra.mxu0 %v945
        %1016 = vmatpush.msra.mxu0 %v943
        %1017 = vmatmul.f32.gmra.mxu0 %v910
        %v1018 = vpop.f32.mrf.mxu0
        %v1019 = vadd.f32 %v999, %v1018
        %1020 = vdwg.mxu0
        %1021 = vmatpush.msra.mxu0 %v942
        %1022 = vmatpush.msra.mxu0 %v940
        %1023 = vmatpush.msra.mxu0 %v938
        %1024 = vmatpush.msra.mxu0 %v936
        %1025 = vmatpush.msra.mxu0 %v934
        %1026 = vmatpush.msra.mxu0 %v932
        %1027 = vmatpush.msra.mxu0 %v930
        %1028 = vmatpush.msra.mxu0 %v928
        %1029 = vmatpush.msra.mxu0 %v926
        %1030 = vmatpush.msra.mxu0 %v924
        %1031 = vmatpush.msra.mxu0 %v922
        %1032 = vmatpush.msra.mxu0 %v920
        %1033 = vmatpush.msra.mxu0 %v918
        %1034 = vmatpush.msra.mxu0 %v916
        %1035 = vmatpush.msra.mxu0 %v914
        %1036 = vmatpush.msra.mxu0 %v912
        %1037 = vmatmul.f32.gmra.mxu0 %v909
        %v1038 = vpop.f32.mrf.mxu0
        %v1039 = vadd.f32 %v978, %v1038
        %1040 = vdwg.mxu0
        %1041 = vmatpush.msra.mxu0 %v974
        %1042 = vmatpush.msra.mxu0 %v972
        %1043 = vmatpush.msra.mxu0 %v970
        %1044 = vmatpush.msra.mxu0 %v968
        %1045 = vmatpush.msra.mxu0 %v966
        %1046 = vmatpush.msra.mxu0 %v964
        %1047 = vmatpush.msra.mxu0 %v962
        %1048 = vmatpush.msra.mxu0 %v960
        %1049 = vmatpush.msra.mxu0 %v958
        %1050 = vmatpush.msra.mxu0 %v956
        %1051 = vmatpush.msra.mxu0 %v954
        %1052 = vmatpush.msra.mxu0 %v952
        %1053 = vmatpush.msra.mxu0 %v950
        %1054 = vmatpush.msra.mxu0 %v948
        %1055 = vmatpush.msra.mxu0 %v946
        %1056 = vmatpush.msra.mxu0 %v944
        %1057 = vmatmul.f32.gmra.mxu0 %v910
        %v1058 = vpop.f32.mrf.mxu0
        %v1059 = vadd.f32 %v1039, %v1058
        %1060 = vdwg.mxu0
        %s1061 = smul.u32 %s43, 2
        %s1062 = smul.addr %s1061, 8
        %s1063 = scalar_lea.vmem [#allocation4], %s1062
        %v1064 = vld [vmem:[%s1063] sm:$0xff]
        %v1065 = vld [vmem:[%s1063 + $0x8] sm:$0xff]
        %s1066 = smul.addr %s1061, 8
        %s1067 = scalar_lea.vmem [#allocation5], %s1066
        %v1068 = vld [vmem:[%s1067] sm:$0xff]
        %v1069 = vld [vmem:[%s1067 + $0x8] sm:$0xff]
        %vm1070 = vcmask 523264
        %v1072 = vsel %vm1070, %v1019, 0
        %v1075 = vsel %vm1070, %v1064, 0
        %1077 = vmatpush.xpose.msra.mxu0 0.0
        %1078 = vmatpush.xpose.msra.mxu0 0.0
        %1079 = vmatpush.xpose.msra.mxu0 0.0
        %1080 = vmatpush.xpose.msra.mxu0 0.0
        %1081 = vmatpush.xpose.msra.mxu0 0.0
        %1082 = vmatpush.xpose.msra.mxu0 0.0
        %1083 = vmatpush.xpose.msra.mxu0 0.0
        %1084 = vmatpush.xpose.msra.mxu0 0.0
        %1085 = vmatpush.xpose.msra.mxu0 0.0
        %1086 = vmatpush.xpose.msra.mxu0 0.0
        %1087 = vmatpush.xpose.msra.mxu0 0.0
        %1088 = vmatpush.xpose.msra.mxu0 0.0
        %1089 = vmatpush.xpose.msra.mxu0 0.0
        %1090 = vmatpush.xpose.msra.mxu0 0.0
        %1091 = vmatpush.xpose.msra.mxu0 0.0
        %1092 = vmatpush.xpose.msra.mxu0 %v1075
        %1093 = vmatmul.f32.gmra.mxu0 %v1072
        %v1094 = vpop.f32.mrf.mxu0
        %v1095 = vadd.f32 0.0, %v1094
        %1096 = vdwg.mxu0
        %vm1097 = vcmask 64512
        %1098 = vst.msk [vmem:[%s584] sm:$0xff] %vm1097, %v1095
        %v1099 = vsel %vm1097, %v1095, -inf
        %1100 = vmax.xlane.f32.xlu0 %v1099
        %v1101 = vpop.xlane.xlu0 %1100
        %v1102 = vsub.f32 %v1095, %v1101
        %v1103 = vmul.f32 %v1102, 1.442695
        %v1104 = vpow.pop %v1103
        %v1105 = vsel %vm1097, %v1104, 0.0
        %1106 = vadd.xlane.f32.xlu0 %v1105
        %v1107 = vpop.xlane.xlu0 %1106
        %v1108 = vrcp.pop %v1107
        %v1109 = vmul.f32 %v1107, %v1108
        %v1110 = vsub.f32 2.0, %v1109
        %v1111 = vmul.f32 %v1108, %v1110
        %v1112 = vmul.f32 %v1104, %v1111
        %v1114 = vsel %vm1097, %v1112, 0
        %1116 = vmatpush.msra.mxu0 0.0
        %1117 = vmatpush.msra.mxu0 0.0
        %1118 = vmatpush.msra.mxu0 0.0
        %1119 = vmatpush.msra.mxu0 0.0
        %1120 = vmatpush.msra.mxu0 0.0
        %1121 = vmatpush.msra.mxu0 0.0
        %1122 = vmatpush.msra.mxu0 0.0
        %1123 = vmatpush.msra.mxu0 0.0
        %1124 = vmatpush.msra.mxu0 0.0
        %1125 = vmatpush.msra.mxu0 0.0
        %1126 = vmatpush.msra.mxu0 0.0
        %1127 = vmatpush.msra.mxu0 0.0
        %1128 = vmatpush.msra.mxu0 0.0
        %1129 = vmatpush.msra.mxu0 0.0
        %1130 = vmatpush.msra.mxu0 0.0
        %1131 = vmatpush.msra.mxu0 %v1068
        %1132 = vmatmul.f32.gmra.mxu0 %v1114
        %v1133 = vpop.f32.mrf.mxu0
        %v1134 = vadd.f32 0.0, %v1133
        %1135 = vdwg.mxu0
        %1136 = vst.msk [vmem:[#allocation3] sm:$0xff] %vm1070, %v1134
        %1137 = vrot.lane.b32.xlu0 %v1019, 64
        %v1138 = vpop.permute.xlu0 %1137
        %1139 = vrot.lane.b32.xlu0 %v1064, 64
        %v1140 = vpop.permute.xlu0 %1139
        %v1141 = vsel %vm1070, %v1138, 0
        %v1143 = vsel %vm1070, %v1140, 0
        %1145 = vmatpush.xpose.msra.mxu0 0.0
        %1146 = vmatpush.xpose.msra.mxu0 0.0
        %1147 = vmatpush.xpose.msra.mxu0 0.0
        %1148 = vmatpush.xpose.msra.mxu0 0.0
        %1149 = vmatpush.xpose.msra.mxu0 0.0
        %1150 = vmatpush.xpose.msra.mxu0 0.0
        %1151 = vmatpush.xpose.msra.mxu0 0.0
        %1152 = vmatpush.xpose.msra.mxu0 0.0
        %1153 = vmatpush.xpose.msra.mxu0 0.0
        %1154 = vmatpush.xpose.msra.mxu0 0.0
        %1155 = vmatpush.xpose.msra.mxu0 0.0
        %1156 = vmatpush.xpose.msra.mxu0 0.0
        %1157 = vmatpush.xpose.msra.mxu0 0.0
        %1158 = vmatpush.xpose.msra.mxu0 0.0
        %1159 = vmatpush.xpose.msra.mxu0 0.0
        %1160 = vmatpush.xpose.msra.mxu0 %v1143
        %1161 = vmatmul.f32.gmra.mxu0 %v1141
        %v1162 = vpop.f32.mrf.mxu0
        %v1163 = vadd.f32 0.0, %v1162
        %1164 = vdwg.mxu0
        %s1165 = scalar_lea.vmem %s584, 8 [#allocation18]
        %1166 = vst.msk [vmem:[%s1165] sm:$0xff] %vm1097, %v1163
        %v1167 = vsel %vm1097, %v1163, -inf
        %1168 = vmax.xlane.f32.xlu0 %v1167
        %v1169 = vpop.xlane.xlu0 %1168
        %v1170 = vsub.f32 %v1163, %v1169
        %v1171 = vmul.f32 %v1170, 1.442695
        %v1172 = vpow.pop %v1171
        %v1173 = vsel %vm1097, %v1172, 0.0
        %1174 = vadd.xlane.f32.xlu0 %v1173
        %v1175 = vpop.xlane.xlu0 %1174
        %v1176 = vrcp.pop %v1175
        %v1177 = vmul.f32 %v1175, %v1176
        %v1178 = vsub.f32 2.0, %v1177
        %v1179 = vmul.f32 %v1176, %v1178
        %v1180 = vmul.f32 %v1172, %v1179
        %1182 = vrot.lane.b32.xlu0 %v1068, 64
        %v1183 = vpop.permute.xlu0 %1182
        %v1186 = vsel %vm1097, %v1180, 0
        %1188 = vmatpush.msra.mxu0 0.0
        %1189 = vmatpush.msra.mxu0 0.0
        %1190 = vmatpush.msra.mxu0 0.0
        %1191 = vmatpush.msra.mxu0 0.0
        %1192 = vmatpush.msra.mxu0 0.0
        %1193 = vmatpush.msra.mxu0 0.0
        %1194 = vmatpush.msra.mxu0 0.0
        %1195 = vmatpush.msra.mxu0 0.0
        %1196 = vmatpush.msra.mxu0 0.0
        %1197 = vmatpush.msra.mxu0 0.0
        %1198 = vmatpush.msra.mxu0 0.0
        %1199 = vmatpush.msra.mxu0 0.0
        %1200 = vmatpush.msra.mxu0 0.0
        %1201 = vmatpush.msra.mxu0 0.0
        %1202 = vmatpush.msra.mxu0 0.0
        %1203 = vmatpush.msra.mxu0 %v1183
        %1204 = vmatmul.f32.gmra.mxu0 %v1186
        %v1205 = vpop.f32.mrf.mxu0
        %v1206 = vadd.f32 0.0, %v1205
        %1207 = vdwg.mxu0
        %1209 = vrot.lane.b32.xlu0 %v1206, 64
        %v1210 = vpop.permute.xlu0 %1209
        %vm1212 = vcmask 1048064
        %1213 = vst.msk [vmem:[#allocation3] sm:$0xff] %vm1212, %v1210
        %v1215 = vsel %vm1070, %v1059, 0
        %v1218 = vsel %vm1070, %v1065, 0
        %1220 = vmatpush.xpose.msra.mxu0 0.0
        %1221 = vmatpush.xpose.msra.mxu0 0.0
        %1222 = vmatpush.xpose.msra.mxu0 0.0
        %1223 = vmatpush.xpose.msra.mxu0 0.0
        %1224 = vmatpush.xpose.msra.mxu0 0.0
        %1225 = vmatpush.xpose.msra.mxu0 0.0
        %1226 = vmatpush.xpose.msra.mxu0 0.0
        %1227 = vmatpush.xpose.msra.mxu0 0.0
        %1228 = vmatpush.xpose.msra.mxu0 0.0
        %1229 = vmatpush.xpose.msra.mxu0 0.0
        %1230 = vmatpush.xpose.msra.mxu0 0.0
        %1231 = vmatpush.xpose.msra.mxu0 0.0
        %1232 = vmatpush.xpose.msra.mxu0 0.0
        %1233 = vmatpush.xpose.msra.mxu0 0.0
        %1234 = vmatpush.xpose.msra.mxu0 0.0
        %1235 = vmatpush.xpose.msra.mxu0 %v1218
        %1236 = vmatmul.f32.gmra.mxu0 %v1215
        %v1237 = vpop.f32.mrf.mxu0
        %v1238 = vadd.f32 0.0, %v1237
        %1239 = vdwg.mxu0
        %s1240 = scalar_lea.vmem %s584, 16 [#allocation18]
        %1241 = vst.msk [vmem:[%s1240] sm:$0xff] %vm1097, %v1238
        %v1242 = vsel %vm1097, %v1238, -inf
        %1243 = vmax.xlane.f32.xlu0 %v1242
        %v1244 = vpop.xlane.xlu0 %1243
        %v1245 = vsub.f32 %v1238, %v1244
        %v1246 = vmul.f32 %v1245, 1.442695
        %v1247 = vpow.pop %v1246
        %v1248 = vsel %vm1097, %v1247, 0.0
        %1249 = vadd.xlane.f32.xlu0 %v1248
        %v1250 = vpop.xlane.xlu0 %1249
        %v1251 = vrcp.pop %v1250
        %v1252 = vmul.f32 %v1250, %v1251
        %v1253 = vsub.f32 2.0, %v1252
        %v1254 = vmul.f32 %v1251, %v1253
        %v1255 = vmul.f32 %v1247, %v1254
        %v1257 = vsel %vm1097, %v1255, 0
        %1259 = vmatpush.msra.mxu0 0.0
        %1260 = vmatpush.msra.mxu0 0.0
        %1261 = vmatpush.msra.mxu0 0.0
        %1262 = vmatpush.msra.mxu0 0.0
        %1263 = vmatpush.msra.mxu0 0.0
        %1264 = vmatpush.msra.mxu0 0.0
        %1265 = vmatpush.msra.mxu0 0.0
        %1266 = vmatpush.msra.mxu0 0.0
        %1267 = vmatpush.msra.mxu0 0.0
        %1268 = vmatpush.msra.mxu0 0.0
        %1269 = vmatpush.msra.mxu0 0.0
        %1270 = vmatpush.msra.mxu0 0.0
        %1271 = vmatpush.msra.mxu0 0.0
        %1272 = vmatpush.msra.mxu0 0.0
        %1273 = vmatpush.msra.mxu0 0.0
        %1274 = vmatpush.msra.mxu0 %v1069
        %1275 = vmatmul.f32.gmra.mxu0 %v1257
        %v1276 = vpop.f32.mrf.mxu0
        %v1277 = vadd.f32 0.0, %v1276
        %1278 = vdwg.mxu0
        %1279 = vst.msk [vmem:[#allocation3 + $0x8] sm:$0xff] %vm1070, %v1277
        %1280 = vrot.lane.b32.xlu0 %v1059, 64
        %v1281 = vpop.permute.xlu0 %1280
        %1282 = vrot.lane.b32.xlu0 %v1065, 64
        %v1283 = vpop.permute.xlu0 %1282
        %v1284 = vsel %vm1070, %v1281, 0
        %v1286 = vsel %vm1070, %v1283, 0
        %1288 = vmatpush.xpose.msra.mxu0 0.0
        %1289 = vmatpush.xpose.msra.mxu0 0.0
        %1290 = vmatpush.xpose.msra.mxu0 0.0
        %1291 = vmatpush.xpose.msra.mxu0 0.0
        %1292 = vmatpush.xpose.msra.mxu0 0.0
        %1293 = vmatpush.xpose.msra.mxu0 0.0
        %1294 = vmatpush.xpose.msra.mxu0 0.0
        %1295 = vmatpush.xpose.msra.mxu0 0.0
        %1296 = vmatpush.xpose.msra.mxu0 0.0
        %1297 = vmatpush.xpose.msra.mxu0 0.0
        %1298 = vmatpush.xpose.msra.mxu0 0.0
        %1299 = vmatpush.xpose.msra.mxu0 0.0
        %1300 = vmatpush.xpose.msra.mxu0 0.0
        %1301 = vmatpush.xpose.msra.mxu0 0.0
        %1302 = vmatpush.xpose.msra.mxu0 0.0
        %1303 = vmatpush.xpose.msra.mxu0 %v1286
        %1304 = vmatmul.f32.gmra.mxu0 %v1284
        %v1305 = vpop.f32.mrf.mxu0
        %v1306 = vadd.f32 0.0, %v1305
        %1307 = vdwg.mxu0
        %s1308 = scalar_lea.vmem %s584, 24 [#allocation18]
        %1309 = vst.msk [vmem:[%s1308] sm:$0xff] %vm1097, %v1306
        %v1310 = vsel %vm1097, %v1306, -inf
        %1311 = vmax.xlane.f32.xlu0 %v1310
        %v1312 = vpop.xlane.xlu0 %1311
        %v1313 = vsub.f32 %v1306, %v1312
        %v1314 = vmul.f32 %v1313, 1.442695
        %v1315 = vpow.pop %v1314
        %v1316 = vsel %vm1097, %v1315, 0.0
        %1317 = vadd.xlane.f32.xlu0 %v1316
        %v1318 = vpop.xlane.xlu0 %1317
        %v1319 = vrcp.pop %v1318
        %v1320 = vmul.f32 %v1318, %v1319
        %v1321 = vsub.f32 2.0, %v1320
        %v1322 = vmul.f32 %v1319, %v1321
        %v1323 = vmul.f32 %v1315, %v1322
        %1325 = vrot.lane.b32.xlu0 %v1069, 64
        %v1326 = vpop.permute.xlu0 %1325
        %v1329 = vsel %vm1097, %v1323, 0
        %1331 = vmatpush.msra.mxu0 0.0
        %1332 = vmatpush.msra.mxu0 0.0
        %1333 = vmatpush.msra.mxu0 0.0
        %1334 = vmatpush.msra.mxu0 0.0
        %1335 = vmatpush.msra.mxu0 0.0
        %1336 = vmatpush.msra.mxu0 0.0
        %1337 = vmatpush.msra.mxu0 0.0
        %1338 = vmatpush.msra.mxu0 0.0
        %1339 = vmatpush.msra.mxu0 0.0
        %1340 = vmatpush.msra.mxu0 0.0
        %1341 = vmatpush.msra.mxu0 0.0
        %1342 = vmatpush.msra.mxu0 0.0
        %1343 = vmatpush.msra.mxu0 0.0
        %1344 = vmatpush.msra.mxu0 0.0
        %1345 = vmatpush.msra.mxu0 0.0
        %1346 = vmatpush.msra.mxu0 %v1326
        %1347 = vmatmul.f32.gmra.mxu0 %v1329
        %v1348 = vpop.f32.mrf.mxu0
        %v1349 = vadd.f32 0.0, %v1348
        %1350 = vdwg.mxu0
        %1352 = vrot.lane.b32.xlu0 %v1349, 64
        %v1353 = vpop.permute.xlu0 %1352
        %1355 = vst.msk [vmem:[#allocation3 + $0x8] sm:$0xff] %vm1212, %v1353
        %v1356 = vld [vmem:[#allocation3] sm:$0xff]
        %v1357 = vld [vmem:[#allocation3 + $0x8] sm:$0xff]
        %v1358 = vld [vmem:[#allocation15] sm:$0xff]
        %v1359 = vld [vmem:[#allocation15 + $0x8] sm:$0xff]
        %v1360 = vld [vmem:[#allocation15 + $0x10] sm:$0xff]
        %v1361 = vld [vmem:[#allocation15 + $0x18] sm:$0xff]
        %v1362 = vld [vmem:[#allocation15 + $0x20] sm:$0xff]
        %v1363 = vld [vmem:[#allocation15 + $0x28] sm:$0xff]
        %v1364 = vld [vmem:[#allocation15 + $0x30] sm:$0xff]
        %v1365 = vld [vmem:[#allocation15 + $0x38] sm:$0xff]
        %v1366 = vld [vmem:[#allocation15 + $0x40] sm:$0xff]
        %v1367 = vld [vmem:[#allocation15 + $0x48] sm:$0xff]
        %v1368 = vld [vmem:[#allocation15 + $0x50] sm:$0xff]
        %v1369 = vld [vmem:[#allocation15 + $0x58] sm:$0xff]
        %v1370 = vld [vmem:[#allocation15 + $0x60] sm:$0xff]
        %v1371 = vld [vmem:[#allocation15 + $0x68] sm:$0xff]
        %v1372 = vld [vmem:[#allocation15 + $0x70] sm:$0xff]
        %v1373 = vld [vmem:[#allocation15 + $0x78] sm:$0xff]
        %v1374 = vld [vmem:[#allocation15 + $0x80] sm:$0xff]
        %v1375 = vld [vmem:[#allocation15 + $0x88] sm:$0xff]
        %v1376 = vld [vmem:[#allocation15 + $0x90] sm:$0xff]
        %v1377 = vld [vmem:[#allocation15 + $0x98] sm:$0xff]
        %v1378 = vld [vmem:[#allocation15 + $0xa0] sm:$0xff]
        %v1379 = vld [vmem:[#allocation15 + $0xa8] sm:$0xff]
        %v1380 = vld [vmem:[#allocation15 + $0xb0] sm:$0xff]
        %v1381 = vld [vmem:[#allocation15 + $0xb8] sm:$0xff]
        %v1382 = vld [vmem:[#allocation15 + $0xc0] sm:$0xff]
        %v1383 = vld [vmem:[#allocation15 + $0xc8] sm:$0xff]
        %v1384 = vld [vmem:[#allocation15 + $0xd0] sm:$0xff]
        %v1385 = vld [vmem:[#allocation15 + $0xd8] sm:$0xff]
        %v1386 = vld [vmem:[#allocation15 + $0xe0] sm:$0xff]
        %v1387 = vld [vmem:[#allocation15 + $0xe8] sm:$0xff]
        %v1388 = vld [vmem:[#allocation15 + $0xf0] sm:$0xff]
        %v1389 = vld [vmem:[#allocation15 + $0xf8] sm:$0xff]
        %v1390 = vld [vmem:[#allocation15 + $0x100] sm:$0xff]
        %v1391 = vld [vmem:[#allocation15 + $0x108] sm:$0xff]
        %v1392 = vld [vmem:[#allocation15 + $0x110] sm:$0xff]
        %v1393 = vld [vmem:[#allocation15 + $0x118] sm:$0xff]
        %v1394 = vld [vmem:[#allocation15 + $0x120] sm:$0xff]
        %v1395 = vld [vmem:[#allocation15 + $0x128] sm:$0xff]
        %v1396 = vld [vmem:[#allocation15 + $0x130] sm:$0xff]
        %v1397 = vld [vmem:[#allocation15 + $0x138] sm:$0xff]
        %v1398 = vld [vmem:[#allocation15 + $0x140] sm:$0xff]
        %v1399 = vld [vmem:[#allocation15 + $0x148] sm:$0xff]
        %v1400 = vld [vmem:[#allocation15 + $0x150] sm:$0xff]
        %v1401 = vld [vmem:[#allocation15 + $0x158] sm:$0xff]
        %v1402 = vld [vmem:[#allocation15 + $0x160] sm:$0xff]
        %v1403 = vld [vmem:[#allocation15 + $0x168] sm:$0xff]
        %v1404 = vld [vmem:[#allocation15 + $0x170] sm:$0xff]
        %v1405 = vld [vmem:[#allocation15 + $0x178] sm:$0xff]
        %v1406 = vld [vmem:[#allocation15 + $0x180] sm:$0xff]
        %v1407 = vld [vmem:[#allocation15 + $0x188] sm:$0xff]
        %v1408 = vld [vmem:[#allocation15 + $0x190] sm:$0xff]
        %v1409 = vld [vmem:[#allocation15 + $0x198] sm:$0xff]
        %v1410 = vld [vmem:[#allocation15 + $0x1a0] sm:$0xff]
        %v1411 = vld [vmem:[#allocation15 + $0x1a8] sm:$0xff]
        %v1412 = vld [vmem:[#allocation15 + $0x1b0] sm:$0xff]
        %v1413 = vld [vmem:[#allocation15 + $0x1b8] sm:$0xff]
        %v1414 = vld [vmem:[#allocation15 + $0x1c0] sm:$0xff]
        %v1415 = vld [vmem:[#allocation15 + $0x1c8] sm:$0xff]
        %v1416 = vld [vmem:[#allocation15 + $0x1d0] sm:$0xff]
        %v1417 = vld [vmem:[#allocation15 + $0x1d8] sm:$0xff]
        %v1418 = vld [vmem:[#allocation15 + $0x1e0] sm:$0xff]
        %v1419 = vld [vmem:[#allocation15 + $0x1e8] sm:$0xff]
        %v1420 = vld [vmem:[#allocation15 + $0x1f0] sm:$0xff]
        %v1421 = vld [vmem:[#allocation15 + $0x1f8] sm:$0xff]
        %1422 = vmatpush.msra.mxu0 %v1388
        %1423 = vmatpush.msra.mxu0 %v1386
        %1424 = vmatpush.msra.mxu0 %v1384
        %1425 = vmatpush.msra.mxu0 %v1382
        %1426 = vmatpush.msra.mxu0 %v1380
        %1427 = vmatpush.msra.mxu0 %v1378
        %1428 = vmatpush.msra.mxu0 %v1376
        %1429 = vmatpush.msra.mxu0 %v1374
        %1430 = vmatpush.msra.mxu0 %v1372
        %1431 = vmatpush.msra.mxu0 %v1370
        %1432 = vmatpush.msra.mxu0 %v1368
        %1433 = vmatpush.msra.mxu0 %v1366
        %1434 = vmatpush.msra.mxu0 %v1364
        %1435 = vmatpush.msra.mxu0 %v1362
        %1436 = vmatpush.msra.mxu0 %v1360
        %1437 = vmatpush.msra.mxu0 %v1358
        %1438 = vmatmul.f32.gmra.mxu0 %v1356
        %v1439 = vpop.f32.mrf.mxu0
        %v1440 = vadd.f32 0.0, %v1439
        %1441 = vdwg.mxu0
        %1442 = vmatpush.msra.mxu0 %v1420
        %1443 = vmatpush.msra.mxu0 %v1418
        %1444 = vmatpush.msra.mxu0 %v1416
        %1445 = vmatpush.msra.mxu0 %v1414
        %1446 = vmatpush.msra.mxu0 %v1412
        %1447 = vmatpush.msra.mxu0 %v1410
        %1448 = vmatpush.msra.mxu0 %v1408
        %1449 = vmatpush.msra.mxu0 %v1406
        %1450 = vmatpush.msra.mxu0 %v1404
        %1451 = vmatpush.msra.mxu0 %v1402
        %1452 = vmatpush.msra.mxu0 %v1400
        %1453 = vmatpush.msra.mxu0 %v1398
        %1454 = vmatpush.msra.mxu0 %v1396
        %1455 = vmatpush.msra.mxu0 %v1394
        %1456 = vmatpush.msra.mxu0 %v1392
        %1457 = vmatpush.msra.mxu0 %v1390
        %1458 = vmatmul.f32.gmra.mxu0 %v1357
        %v1459 = vpop.f32.mrf.mxu0
        %v1460 = vadd.f32 %v1440, %v1459
        %1461 = vdwg.mxu0
        %1462 = vmatpush.msra.mxu0 %v1389
        %1463 = vmatpush.msra.mxu0 %v1387
        %1464 = vmatpush.msra.mxu0 %v1385
        %1465 = vmatpush.msra.mxu0 %v1383
        %1466 = vmatpush.msra.mxu0 %v1381
        %1467 = vmatpush.msra.mxu0 %v1379
        %1468 = vmatpush.msra.mxu0 %v1377
        %1469 = vmatpush.msra.mxu0 %v1375
        %1470 = vmatpush.msra.mxu0 %v1373
        %1471 = vmatpush.msra.mxu0 %v1371
        %1472 = vmatpush.msra.mxu0 %v1369
        %1473 = vmatpush.msra.mxu0 %v1367
        %1474 = vmatpush.msra.mxu0 %v1365
        %1475 = vmatpush.msra.mxu0 %v1363
        %1476 = vmatpush.msra.mxu0 %v1361
        %1477 = vmatpush.msra.mxu0 %v1359
        %1478 = vmatmul.f32.gmra.mxu0 %v1356
        %v1479 = vpop.f32.mrf.mxu0
        %v1480 = vadd.f32 0.0, %v1479
        %1481 = vdwg.mxu0
        %1482 = vmatpush.msra.mxu0 %v1421
        %1483 = vmatpush.msra.mxu0 %v1419
        %1484 = vmatpush.msra.mxu0 %v1417
        %1485 = vmatpush.msra.mxu0 %v1415
        %1486 = vmatpush.msra.mxu0 %v1413
        %1487 = vmatpush.msra.mxu0 %v1411
        %1488 = vmatpush.msra.mxu0 %v1409
        %1489 = vmatpush.msra.mxu0 %v1407
        %1490 = vmatpush.msra.mxu0 %v1405
        %1491 = vmatpush.msra.mxu0 %v1403
        %1492 = vmatpush.msra.mxu0 %v1401
        %1493 = vmatpush.msra.mxu0 %v1399
        %1494 = vmatpush.msra.mxu0 %v1397
        %1495 = vmatpush.msra.mxu0 %v1395
        %1496 = vmatpush.msra.mxu0 %v1393
        %1497 = vmatpush.msra.mxu0 %v1391
        %1498 = vmatmul.f32.gmra.mxu0 %v1357
        %v1499 = vpop.f32.mrf.mxu0
        %v1500 = vadd.f32 %v1480, %v1499
        %1501 = vdwg.mxu0
        %p1502 = scmp.eq.s32.totalorder %s43, 0
        // Predicated region
        $region85: #{tpu_custom_call.1} parent=55 // pred_check
          %p1503 = pneg %p1502
        $region86: #{tpu_custom_call.1} parent=55 // pred_check_branch
          %1505 = sbr.rel (%p1503) target = $region88
        $region87: #{tpu_custom_call.1} parent=55 // pred_region
          %1506 = vst [vmem:[#allocation2] sm:$0xff] 0.0
          %1507 = vst [vmem:[#allocation2 + $0x8] sm:$0xff] 0.0
        $region88: #{tpu_custom_call.1} parent=55 // pred_fallthru
          _
        %v1508 = vld [vmem:[#allocation2] sm:$0xff]
        %v1509 = vld [vmem:[#allocation2 + $0x8] sm:$0xff]
        %v1510 = vadd.f32 %v1508, %v1460
        %v1511 = vadd.f32 %v1509, %v1500
        %1512 = vst [vmem:[#allocation2] sm:$0xff] %v1510
        %1513 = vst [vmem:[#allocation2 + $0x8] sm:$0xff] %v1511
        // Predicated region
        $region89: #{tpu_custom_call.1} parent=55 // pred_check
          %p1514 = pneg %p1502
        $region90: #{tpu_custom_call.1} parent=55 // pred_check_branch
          %1516 = sbr.rel (%p1514) target = $region92
        $region91: #{tpu_custom_call.1} parent=55 // pred_region
          %v1517 = vld [vmem:[#allocation2] sm:$0xff]
          %v1518 = vld [vmem:[#allocation2 + $0x8] sm:$0xff]
          %v1519 = vld [vmem:[%s8] sm:$0x3]
          %v1521 = vperm.slane %v1519, 0
          %v1522 = vperm.slane %v1519, 1
          %v1525 = vadd.f32 %v1517, %v1521
          %v1526 = vadd.f32 %v1518, %v1522
          %1527 = vst [vmem:[%s577] sm:$0xff] %v1525
          %1528 = vst [vmem:[%s577 + $0x8] sm:$0xff] %v1526
        $region92: #{tpu_custom_call.1} parent=55 // pred_fallthru
          _
        %s1529 = sand.u32 %s296, 1
        %s1530 = scalar_lea.sflag [#allocation8], %s1529
        %s1531 = sand.u32 %s296, 1
        %s1532 = smul.addr %s1531, 16
        %s1533 = scalar_lea.vmem [#allocation17], %s1532
        %s1534 = sand.u32 %s326, 1
        %s1535 = scalar_lea.sflag [#allocation19], %s1534
        %s1536 = sand.u32 %s326, 1
        %s1537 = smul.addr %s1536, 32
        %s1538 = scalar_lea.vmem [#allocation18], %s1537
        // Predicated region
        $region93: #{tpu_custom_call.1} parent=55 // pred_check
          %p1539 = pneg %p306
        $region94: #{tpu_custom_call.1} parent=55 // pred_check_branch
          %1541 = sbr.rel (%p1539) target = $region96
        $region95: #{tpu_custom_call.1} parent=55 // pred_region
          %1543 = vsyncadd %s1530, 0
          %s1544 = smul.addr %s42, 2
          %s1545 = smul.addr %s41, 2
          %s1546 = sadd.s32 %s1544, %s1545
          %s1547 = smul.addr %s1546, 8
          %s1548 = scalar_lea.hbm %s9, %s1547
          %s1550 = sshll.u32 %s1533, 4
          %s1551 = int_to_ptr.vmem [resolvable:$true] %s1550
          %s1552 = sshll.u32 %s1548, 4
          %s1553 = int_to_ptr.hbm [resolvable:$true] %s1552
          %1555 = dma.vmem_to_hbm [thread:$0]  %s1551, 256, %s1553, %s1530
        $region96: #{tpu_custom_call.1} parent=55 // pred_fallthru
          _
        // Predicated region
        $region97: #{tpu_custom_call.1} parent=55 // pred_check
          %p1556 = pneg %p336
        $region98: #{tpu_custom_call.1} parent=55 // pred_check_branch
          %1558 = sbr.rel (%p1556) target = $region100
        $region99: #{tpu_custom_call.1} parent=55 // pred_region
          %s1559 = smul.u32 4, %s43
          %1561 = vsyncadd %s1535, 0
          %s1562 = sadd.s32 %s42, %s1559
          %s1563 = smul.addr %s41, 4
          %s1564 = sadd.s32 %s1562, %s1563
          %s1565 = smul.addr %s1564, 8
          %s1566 = scalar_lea.hbm %s10, %s1565
          %s1567 = sshll.u32 %s1538, 4
          %s1568 = int_to_ptr.vmem [resolvable:$true] %s1567
          %s1569 = sshll.u32 %s1566, 4
          %s1570 = int_to_ptr.hbm [resolvable:$true] %s1569
          %1575 = dma.vmem_to_hbm [thread:$0]  %s1568, 512, %s1570, %s1535, 128, 128, 8
        $region100: #{tpu_custom_call.1} parent=55 // pred_fallthru
          _
      $region56: #{tpu_custom_call.1} parent=5 // pred_fallthru
        _
      %p1576 = scmp.le.s32.totalorder 2, %s31
      // Predicated region
      $region101: #{tpu_custom_call.1} parent=5 // pred_check
        %p1577 = pneg %p1576
      $region102: #{tpu_custom_call.1} parent=5 // pred_check_branch
        %1579 = sbr.rel (%p1577) target = $region104
      $region103: #{tpu_custom_call.1} parent=5 // pred_region
        %s1580 = ssub.s32 %s31, 2
        // Predicated region
        $region105: #{tpu_custom_call.1} parent=103 // pred_check
          %p1581 = pneg %p312
        $region106: #{tpu_custom_call.1} parent=103 // pred_check_branch
          %1583 = sbr.rel (%p1581) target = $region108
        $region107: #{tpu_custom_call.1} parent=103 // pred_region
          %s1584 = sand.u32 %s297, 1
          %s1585 = scalar_lea.sflag [#allocation8], %s1584
          %s1586 = sand.u32 %s297, 1
          %s1587 = smul.addr %s1586, 16
          %s1588 = scalar_lea.vmem [#allocation17], %s1587
          %1590 = dma.done %s1585, 256
        $region108: #{tpu_custom_call.1} parent=103 // pred_fallthru
          _
        // Predicated region
        $region109: #{tpu_custom_call.1} parent=103 // pred_check
          %p1591 = pneg %p342
        $region110: #{tpu_custom_call.1} parent=103 // pred_check_branch
          %1593 = sbr.rel (%p1591) target = $region112
        $region111: #{tpu_custom_call.1} parent=103 // pred_region
          %s1594 = sand.u32 %s327, 1
          %s1595 = scalar_lea.sflag [#allocation19], %s1594
          %s1596 = sand.u32 %s327, 1
          %s1597 = smul.addr %s1596, 32
          %s1598 = scalar_lea.vmem [#allocation18], %s1597
          %1600 = dma.done %s1595, 512
        $region112: #{tpu_custom_call.1} parent=103 // pred_fallthru
          _
      $region104: #{tpu_custom_call.1} parent=5 // pred_fallthru
        _
    $region6: #{tpu_custom_call.1} parent=1 // loop_footer
      %s35 = sadd.s32 1, %s31
    $region7: #{tpu_custom_call.1} parent=1 // loop_footer_branch
      %30 = sbr.rel target = $region3
    $region8: #{tpu_custom_call.1} parent=1 // loop_exit
      _
    %1601 = vsyncpa [#allocation7], 1
    %s1602 = scalar_lea.sflag [#allocation7], 1
    %1603 = vsyncpa %s1602, 1
    %1604 = vsyncpa [#allocation10], 1
    %s1605 = scalar_lea.sflag [#allocation10], 1
    %1606 = vsyncpa %s1605, 1
    %1607 = vsyncpa [#allocation13], 1
    %1608 = vsyncpa [#allocation16], 1
    %1609 = vsyncpa [#allocation8], 1
    %s1610 = scalar_lea.sflag [#allocation8], 1
    %1611 = vsyncpa %s1610, 1
    %1612 = vsyncpa [#allocation19], 1
    %s1613 = scalar_lea.sflag [#allocation19], 1
    %1614 = vsyncpa %s1613, 1

</llo_original>
